<compile_context>
chip_gen: v6e
topology: v6e:2x2x1
jax: 0.10.0
libtpu: 0.0.40
codegen_flags: <defaults>
</compile_context>

<pallas_src>
import functools

import jax
import jax.numpy as jnp
import numpy as np
from jax.experimental import pallas as pl
from jax.experimental.pallas import tpu as pltpu

EPS = 1e-5


# --------------------------------------------------------------------------- #
# Per-generation VMEM sizing helpers
# --------------------------------------------------------------------------- #
def _vmem_limit_bytes():
    """Scoped-VMEM request: ~3/4 of physical, capped at 96 MiB.
    v5e/v6e (128 MiB physical) -> 96 MiB; v7x (64 MiB physical) -> 48 MiB."""
    try:
        cap = int(pltpu.get_tpu_info().vmem_capacity_bytes)
    except Exception:
        cap = 64 * 1024 * 1024          # conservative fallback (fits v7x too)
    return max(32 * 1024 * 1024, min(96 * 1024 * 1024, (cap * 3) // 4))


def _pick_tile(num_rows, unit, bytes_per_unit_row, vmem_budget, target_units):
    """Pick rows-per-tile g: a divisor of num_rows whose flat extent (g*unit) is
    sublane-aligned (or the full array) and fits the VMEM byte budget, preferring
    >= 2 grid steps (pipelining + v7x megacore), then the largest tile not
    exceeding target_units flat rows."""
    cands = []
    for g in range(1, num_rows + 1):
        if num_rows % g:
            continue
        u = g * unit
        if (u % 8) and g != num_rows:            # (8,128) sublane rule (or full dim)
            continue
        if u * bytes_per_unit_row > vmem_budget:
            continue
        cands.append(g)
    if not cands:
        # TODO(synk): pad num_rows to an aligned multiple instead of one big tile.
        return num_rows
    multi = [g for g in cands if num_rows // g >= 2] or cands
    under = [g for g in multi if g * unit <= target_units]
    return max(under) if under else min(multi)


# --------------------------------------------------------------------------- #
# Pass 1: tiled conv (3 GEMM taps, K = 3*Cin) + BatchNorm partial statistics
# --------------------------------------------------------------------------- #
def _conv_stats_kernel(x_ref, w_ref, mask_ref, out_ref, sum_ref, ssq_ref,
                       *, Lc, Cout):
    """One tile of TH image rows (L = TH*Wp2 flat rows, Lc = L - 2 computed).

    x_ref    : (L, 3*Cin)       bf16  row taps pre-concatenated along channels
    w_ref    : (3, 3*Cin, Cout) bf16  one K = 3*Cin weight slab per kernel column
    mask_ref : (L, 1)           f32   1.0 where the flat row is a valid width pos
    out_ref  : (L, Cout)        bf16  conv output (padded-width layout)
    sum_ref  : (8, Cout)        f32   per-channel partial sum (row-replicated)
    ssq_ref  : (8, Cout)        f32   per-channel partial sum of squares
    """
    # Column tap c == shift the bf16 input by c flat rows (cheaper than slicing
    # the f32 accumulator); each dot contracts over K = 3*Cin (all row taps).
    acc = jnp.dot(x_ref[pl.ds(0, Lc), :], w_ref[0],
                  preferred_element_type=jnp.float32)
    acc = acc + jnp.dot(x_ref[pl.ds(1, Lc), :], w_ref[1],
                        preferred_element_type=jnp.float32)
    acc = acc + jnp.dot(x_ref[pl.ds(2, Lc), :], w_ref[2],
                        preferred_element_type=jnp.float32)

    # BatchNorm partial statistics over valid (non width-padding) positions,
    # taken from the f32 accumulator BEFORE the bf16 cast of the intermediate.
    masked = acc * mask_ref[pl.ds(0, Lc), :]
    sum_ref[...] = jnp.broadcast_to(jnp.sum(masked, axis=0, keepdims=True),
                                    (8, Cout))
    ssq_ref[...] = jnp.broadcast_to(jnp.sum(masked * acc, axis=0, keepdims=True),
                                    (8, Cout))

    out_ref[pl.ds(0, Lc), :] = acc.astype(out_ref.dtype)
    out_ref[pl.ds(Lc, 2), :] = jnp.zeros((2, Cout), out_ref.dtype)


# --------------------------------------------------------------------------- #
# Pass 2: lane-dense fused BN affine + ReLU (bf16 in, f32 out)
# --------------------------------------------------------------------------- #
def _bn_relu_kernel(x_ref, scale_ref, shift_ref, out_ref):
    x = x_ref[...].astype(jnp.float32)
    out_ref[...] = jnp.maximum(x * scale_ref[...] + shift_ref[...], 0.0)


# --------------------------------------------------------------------------- #
# Wrapper
# --------------------------------------------------------------------------- #
def transpose_conv_bn_relu(x_nchw, weight, bias, gamma, beta, stride=1, eps=EPS):
    """Forward of TransposeConvBNRelu.

    x_nchw : (N, Cin, H, W)   weight : (Cin, Cout, 3, 3)  (PyTorch layout)
    bias   : accepted for API parity; train-mode BN subtracts the batch mean, so
             a per-channel constant before BN cancels exactly -> unused.
    """
    assert stride == 1, "TODO(synk): stride > 1 not implemented"
    del bias  # mathematically a no-op under train-mode BatchNorm
    N, Cin, H, W = x_nchw.shape
    Cout = weight.shape[1]
    Wp2 = W + 2
    R = N * H                      # flattened (batch, image-row) count
    K3 = 3 * Cin
    vmem_limit = _vmem_limit_bytes()

    # ConvTranspose2d(s=1,p=1,k=3) == correlation(pad=1) with the flipped,
    # channel-swapped kernel.  One (3*Cin, Cout) weight slab per kernel COLUMN c,
    # whose K-block r holds weight[ci, co, 2-r, 2-c].
    wf = weight[:, :, ::-1, ::-1]                        # [ci,co,r,c] = W[ci,co,2-r,2-c]
    w_col = jnp.transpose(wf, (3, 2, 0, 1)).reshape(3, K3, Cout).astype(jnp.bfloat16)

    # Single input stream: the three row-shifted padded views concatenated along
    # the channel axis, flattened row-major over (N, H, Wp2).
    x_nhwc = jnp.transpose(x_nchw, (0, 2, 3, 1)).astype(jnp.bfloat16)
    x_pad = jnp.pad(x_nhwc, ((0, 0), (1, 1), (1, 1), (0, 0)))     # (N, H+2, Wp2, Cin)
    x_cat = jnp.concatenate([x_pad[:, r:r + H] for r in range(3)], axis=-1)
    x_cat = x_cat.reshape(R * Wp2, K3)                            # (R*Wp2, 3*Cin) bf16

    # ---- Pass 1: conv taps + BN partial stats --------------------------------
    # Per-flat-row VMEM: double-buffered x/out/mask blocks + f32 acc temps.
    bytes_per_flat_row = 10 * K3 + 12 * Cout + 8
    fixed = 12 * K3 * Cout + 256 * Cout                  # weights + stat tiles
    budget1 = max(vmem_limit // 2 - fixed, 1)
    TH = _pick_tile(R, Wp2, bytes_per_flat_row, budget1, target_units=2048)
    L = TH * Wp2                   # flat rows per tile (padded-width layout)
    Lc = L - 2                     # rows actually computed (last 2 are width pad)
    ntiles = R // TH

    row_mask = (jnp.arange(L, dtype=jnp.int32) % Wp2 < W).astype(jnp.float32)
    row_mask = row_mask.reshape(L, 1)

    kernel1 = functools.partial(_conv_stats_kernel, Lc=Lc, Cout=Cout)
    conv_bf16, psum, pssq = pl.pallas_call(
        kernel1,
        grid=(ntiles,),
        in_specs=[pl.BlockSpec((L, K3), lambda i: (i, 0)),
                  pl.BlockSpec((3, K3, Cout), lambda i: (0, 0, 0)),
                  pl.BlockSpec((L, 1), lambda i: (0, 0))],
        out_specs=(pl.BlockSpec((L, Cout), lambda i: (i, 0)),
                   pl.BlockSpec((8, Cout), lambda i: (i, 0)),
                   pl.BlockSpec((8, Cout), lambda i: (i, 0))),
        out_shape=(jax.ShapeDtypeStruct((R * Wp2, Cout), jnp.bfloat16),
                   jax.ShapeDtypeStruct((8 * ntiles, Cout), jnp.float32),
                   jax.ShapeDtypeStruct((8 * ntiles, Cout), jnp.float32)),
        compiler_params=pltpu.CompilerParams(
            dimension_semantics=("parallel",),
            vmem_limit_bytes=vmem_limit),
    )(x_cat, w_col, row_mask)

    # Tiny two-phase BN reduction in plain JAX; fold BN into one scale/shift per
    # channel (single FMA per element in pass 2).
    # NOTE: var = E[x^2] - mean^2 in f32 can cancel when |mean| >> std; fine here
    # (conv outputs are ~zero-mean).  TODO(synk): Welford-merge the per-tile
    # partials for very large N*H*W.
    count = jnp.float32(N * H * W)
    total = jnp.sum(psum.reshape(ntiles, 8, Cout)[:, 0, :], axis=0)
    totsq = jnp.sum(pssq.reshape(ntiles, 8, Cout)[:, 0, :], axis=0)
    mean = total / count
    var = jnp.maximum(totsq / count - mean * mean, 0.0)   # biased batch variance
    inv_std = jax.lax.rsqrt(var + eps)
    scale = gamma.astype(jnp.float32) * inv_std
    shift = beta.astype(jnp.float32) - mean * scale

    # ---- Pass 2: lane-dense fused BN affine + ReLU ---------------------------
    LW = Wp2 * Cout
    x2d = conv_bf16.reshape(R, LW)                 # contiguous -> free reshape
    scale_l = jnp.tile(scale, Wp2).reshape(1, LW)
    shift_l = jnp.tile(shift, Wp2).reshape(1, LW)

    budget2 = max(vmem_limit // 2 - 4 * LW * 4, 1)
    TH2 = _pick_tile(R, 1, 16 * LW, budget2, target_units=4096)
    out2d = pl.pallas_call(
        _bn_relu_kernel,
        grid=(R // TH2,),
        in_specs=[pl.BlockSpec((TH2, LW), lambda i: (i, 0)),
                  pl.BlockSpec((1, LW), lambda i: (0, 0)),
                  pl.BlockSpec((1, LW), lambda i: (0, 0))],
        out_specs=pl.BlockSpec((TH2, LW), lambda i: (i, 0)),
        out_shape=jax.ShapeDtypeStruct((R, LW), jnp.float32),
        compiler_params=pltpu.CompilerParams(
            dimension_semantics=("parallel",),
            vmem_limit_bytes=vmem_limit),
    )(x2d, scale_l, shift_l)

    out = out2d.reshape(N, H, Wp2, Cout)[:, :, :W, :]     # drop width padding
    return jnp.transpose(out, (0, 3, 1, 2))               # back to NCHW


# --------------------------------------------------------------------------- #
# NumPy reference (PyTorch semantics: ConvTranspose2d -> BatchNorm2d(train) -> ReLU)
# --------------------------------------------------------------------------- #
def _reference_forward(x, W, b, gamma, beta, eps=EPS):
    x = np.asarray(x, np.float64)
    W = np.asarray(W, np.float64)
    b = np.asarray(b, np.float64)
    gamma = np.asarray(gamma, np.float64)
    beta = np.asarray(beta, np.float64)
    N, Cin, H, Wd = x.shape
    Cout = W.shape[1]
    yfull = np.zeros((N, Cout, H + 2, Wd + 2), np.float64)
    for kh in range(3):
        for kw in range(3):
            yfull[:, :, kh:kh + H, kw:kw + Wd] += np.einsum(
                'nchw,cd->ndhw', x, W[:, :, kh, kw])
    y = yfull[:, :, 1:-1, 1:-1] + b[None, :, None, None]
    mean = y.mean(axis=(0, 2, 3), keepdims=True)
    var = y.var(axis=(0, 2, 3), keepdims=True)       # biased, as PyTorch normalizes
    yhat = (y - mean) / np.sqrt(var + eps)
    out = gamma[None, :, None, None] * yhat + beta[None, :, None, None]
    return np.maximum(out, 0.0)


if __name__ == "__main__":
    key = jax.random.PRNGKey(0)
    kx, kw, kb, kg, kbeta = jax.random.split(key, 5)

    N, Cin, Cout, H, W = 2, 4, 8, 16, 16
    x = jax.random.normal(kx, (N, Cin, H, W), jnp.float32)
    weight = 0.1 * jax.random.normal(kw, (Cin, Cout, 3, 3), jnp.float32)  # torch layout
    bias = 0.1 * jax.random.normal(kb, (Cout,), jnp.float32)
    gamma = 1.0 + 0.1 * jax.random.normal(kg, (Cout,), jnp.float32)
    beta = 0.1 * jax.random.normal(kbeta, (Cout,), jnp.float32)

    out = transpose_conv_bn_relu(x, weight, bias, gamma, beta, stride=1)
    out = jax.block_until_ready(out)

    ref = _reference_forward(x, weight, bias, gamma, beta)
    # bf16 matmul operands + bf16 inter-pass intermediate (f32 accumulation and
    # f32 BN statistics) -> a few 1e-3 abs error expected
    np.testing.assert_allclose(np.asarray(out), ref, rtol=2e-2, atol=2e-2)

    print("KERNEL_OK")
</pallas_src>

<mosaic_0001>
module attributes {stable_mosaic.version = 11 : i64} {
  func.func @_conv_stats_kernel(%arg0: i32, %arg1: memref<288x12xbf16, #tpu.memory_space<vmem>>, %arg2: memref<3x12x8xbf16, #tpu.memory_space<vmem>>, %arg3: memref<288x1xf32, #tpu.memory_space<vmem>>, %arg4: memref<288x8xbf16, #tpu.memory_space<vmem>>, %arg5: memref<8x8xf32, #tpu.memory_space<vmem>>, %arg6: memref<8x8xf32, #tpu.memory_space<vmem>>) attributes {dimension_semantics = [#tpu.dimension_semantics<parallel>], iteration_bounds = array<i64: 2>, scalar_prefetch = 0 : i64, scratch_operands = 0 : i64, tpu.core_type = #tpu.core_type<tc>, window_params = [{transform_indices = @transform_0, window_bounds = array<i64: 288, 12>}, {pipeline_mode = #tpu.pipeline_mode<synchronous>, transform_indices = @transform_1, window_bounds = array<i64: 3, 12, 8>}, {pipeline_mode = #tpu.pipeline_mode<synchronous>, transform_indices = @transform_2, window_bounds = array<i64: 288, 1>}, {transform_indices = @transform_3, window_bounds = array<i64: 288, 8>}, {transform_indices = @transform_4, window_bounds = array<i64: 8, 8>}, {transform_indices = @transform_5, window_bounds = array<i64: 8, 8>}]} {
    %c0 = arith.constant 0 : index
    %c0_0 = arith.constant 0 : index
    %0 = vector.load %arg1[%c0, %c0_0] : memref<288x12xbf16, #tpu.memory_space<vmem>>, vector<286x12xbf16>
    %c0_1 = arith.constant 0 : index
    %c0_2 = arith.constant 0 : index
    %c0_3 = arith.constant 0 : index
    %1 = vector.load %arg2[%c0_1, %c0_2, %c0_3] : memref<3x12x8xbf16, #tpu.memory_space<vmem>>, vector<1x12x8xbf16>
    %2 = vector.shape_cast %1 : vector<1x12x8xbf16> to vector<12x8xbf16>
    %cst = arith.constant dense<0.000000e+00> : vector<286x8xf32>
    %3 = tpu.matmul %0, %2, %cst {dimension_numbers = #tpu.dot_dimension_numbers<[1], [0], [0], [1], [0, 0, 1, 1], [], []>} : vector<286x12xbf16>, vector<12x8xbf16>, vector<286x8xf32> -> vector<286x8xf32>
    %c1 = arith.constant 1 : index
    %c0_4 = arith.constant 0 : index
    %4 = vector.load %arg1[%c1, %c0_4] : memref<288x12xbf16, #tpu.memory_space<vmem>>, vector<286x12xbf16>
    %c1_5 = arith.constant 1 : index
    %c0_6 = arith.constant 0 : index
    %c0_7 = arith.constant 0 : index
    %5 = vector.load %arg2[%c1_5, %c0_6, %c0_7] : memref<3x12x8xbf16, #tpu.memory_space<vmem>>, vector<1x12x8xbf16>
    %6 = vector.shape_cast %5 : vector<1x12x8xbf16> to vector<12x8xbf16>
    %cst_8 = arith.constant dense<0.000000e+00> : vector<286x8xf32>
    %7 = tpu.matmul %4, %6, %cst_8 {dimension_numbers = #tpu.dot_dimension_numbers<[1], [0], [0], [1], [0, 0, 1, 1], [], []>} : vector<286x12xbf16>, vector<12x8xbf16>, vector<286x8xf32> -> vector<286x8xf32>
    %8 = arith.addf %3, %7 : vector<286x8xf32>
    %c2 = arith.constant 2 : index
    %c0_9 = arith.constant 0 : index
    %9 = vector.load %arg1[%c2, %c0_9] : memref<288x12xbf16, #tpu.memory_space<vmem>>, vector<286x12xbf16>
    %c2_10 = arith.constant 2 : index
    %c0_11 = arith.constant 0 : index
    %c0_12 = arith.constant 0 : index
    %10 = vector.load %arg2[%c2_10, %c0_11, %c0_12] : memref<3x12x8xbf16, #tpu.memory_space<vmem>>, vector<1x12x8xbf16>
    %11 = vector.shape_cast %10 : vector<1x12x8xbf16> to vector<12x8xbf16>
    %cst_13 = arith.constant dense<0.000000e+00> : vector<286x8xf32>
    %12 = tpu.matmul %9, %11, %cst_13 {dimension_numbers = #tpu.dot_dimension_numbers<[1], [0], [0], [1], [0, 0, 1, 1], [], []>} : vector<286x12xbf16>, vector<12x8xbf16>, vector<286x8xf32> -> vector<286x8xf32>
    %13 = arith.addf %8, %12 : vector<286x8xf32>
    %c0_14 = arith.constant 0 : index
    %c0_15 = arith.constant 0 : index
    %14 = vector.load %arg3[%c0_14, %c0_15] : memref<288x1xf32, #tpu.memory_space<vmem>>, vector<286x1xf32>
    %15 = vector.broadcast %14 : vector<286x1xf32> to vector<286x8xf32>
    %16 = arith.mulf %13, %15 : vector<286x8xf32>
    %cst_16 = arith.constant dense<0.000000e+00> : vector<8xf32>
    %17 = vector.multi_reduction <add>, %16, %cst_16 [0] : vector<286x8xf32> to vector<8xf32>
    %18 = vector.shape_cast %17 : vector<8xf32> to vector<1x8xf32>
    %19 = vector.shape_cast %18 : vector<1x8xf32> to vector<1x8xf32>
    %20 = vector.broadcast %19 : vector<1x8xf32> to vector<8x8xf32>
    %c0_17 = arith.constant 0 : index
    %c0_18 = arith.constant 0 : index
    %21 = vector.load %arg5[%c0_17, %c0_18] : memref<8x8xf32, #tpu.memory_space<vmem>>, vector<8x8xf32>
    tpu.vector_store %arg5[%c0_17, %c0_18], %20 {strides = array<i32>} : memref<8x8xf32, #tpu.memory_space<vmem>>, vector<8x8xf32>,
    %22 = arith.mulf %16, %13 : vector<286x8xf32>
    %cst_19 = arith.constant dense<0.000000e+00> : vector<8xf32>
    %23 = vector.multi_reduction <add>, %22, %cst_19 [0] : vector<286x8xf32> to vector<8xf32>
    %24 = vector.shape_cast %23 : vector<8xf32> to vector<1x8xf32>
    %25 = vector.shape_cast %24 : vector<1x8xf32> to vector<1x8xf32>
    %26 = vector.broadcast %25 : vector<1x8xf32> to vector<8x8xf32>
    %c0_20 = arith.constant 0 : index
    %c0_21 = arith.constant 0 : index
    %27 = vector.load %arg6[%c0_20, %c0_21] : memref<8x8xf32, #tpu.memory_space<vmem>>, vector<8x8xf32>
    tpu.vector_store %arg6[%c0_20, %c0_21], %26 {strides = array<i32>} : memref<8x8xf32, #tpu.memory_space<vmem>>, vector<8x8xf32>,
    %28 = arith.truncf %13 : vector<286x8xf32> to vector<286x8xbf16>
    %c0_22 = arith.constant 0 : index
    %c0_23 = arith.constant 0 : index
    %29 = vector.load %arg4[%c0_22, %c0_23] : memref<288x8xbf16, #tpu.memory_space<vmem>>, vector<286x8xbf16>
    tpu.vector_store %arg4[%c0_22, %c0_23], %28 {strides = array<i32>} : memref<288x8xbf16, #tpu.memory_space<vmem>>, vector<286x8xbf16>,
    %cst_24 = arith.constant 0.000000e+00 : bf16
    %30 = vector.broadcast %cst_24 : bf16 to vector<2x8xbf16>
    %c286 = arith.constant 286 : index
    %c0_25 = arith.constant 0 : index
    %31 = vector.load %arg4[%c286, %c0_25] : memref<288x8xbf16, #tpu.memory_space<vmem>>, vector<2x8xbf16>
    tpu.vector_store %arg4[%c286, %c0_25], %30 {strides = array<i32>} : memref<288x8xbf16, #tpu.memory_space<vmem>>, vector<2x8xbf16>,
    return
  }
  func.func @transform_0(%arg0: i32) -> (i32, i32) {
    %c0_i32 = arith.constant 0 : i32
    %c0_i32_0 = arith.constant 0 : i32
    return %arg0, %c0_i32 : i32, i32
  }
  func.func @transform_1(%arg0: i32) -> (i32, i32, i32) {
    %c0_i32 = arith.constant 0 : i32
    %c0_i32_0 = arith.constant 0 : i32
    %c0_i32_1 = arith.constant 0 : i32
    %c0_i32_2 = arith.constant 0 : i32
    return %c0_i32, %c0_i32_0, %c0_i32_1 : i32, i32, i32
  }
  func.func @transform_2(%arg0: i32) -> (i32, i32) {
    %c0_i32 = arith.constant 0 : i32
    %c0_i32_0 = arith.constant 0 : i32
    %c0_i32_1 = arith.constant 0 : i32
    return %c0_i32, %c0_i32_0 : i32, i32
  }
  func.func @transform_3(%arg0: i32) -> (i32, i32) {
    %c0_i32 = arith.constant 0 : i32
    %c0_i32_0 = arith.constant 0 : i32
    return %arg0, %c0_i32 : i32, i32
  }
  func.func @transform_4(%arg0: i32) -> (i32, i32) {
    %c0_i32 = arith.constant 0 : i32
    %c0_i32_0 = arith.constant 0 : i32
    return %arg0, %c0_i32 : i32, i32
  }
  func.func @transform_5(%arg0: i32) -> (i32, i32) {
    %c0_i32 = arith.constant 0 : i32
    %c0_i32_0 = arith.constant 0 : i32
    return %arg0, %c0_i32 : i32, i32
  }
}

</mosaic_0001>

<llo_original>
// kernel: tpu_custom_call.1
$region0: #{tpu_custom_call.1}
  #allocation0 [shape = 'u32[]', space=smem, size = 0x4, offset = 0x4, fixed_abs, tag = 'smem constant byte address 0x4 - core index']
  #allocation1 [shape = 'u32[144,128]{1,0:T(1,128)}', space=vmem, size = 0x12000, scoped, tag = 'internal scratch']
  %s0 = inlined_call_operand.vmem [shape: bf16[576,12], index: 0, kind: input, shape index: {}]
  %s1 = inlined_call_operand.vmem [shape: bf16[3,12,8], index: 1, kind: input, shape index: {}]
  %s2 = inlined_call_operand.vmem [shape: f32[288,1], index: 2, kind: input, shape index: {}]
  %s3 = inlined_call_operand.vmem [shape: bf16[576,8], index: 3, kind: output, shape index: {0}]
  %s4 = inlined_call_operand.vmem [shape: f32[16,8], index: 4, kind: output, shape index: {1}]
  %s5 = inlined_call_operand.vmem [shape: f32[16,8], index: 5, kind: output, shape index: {2}]
  %6 = xla_tuple %s3, %s4, %s5
  %s7 = sld [smem:[#allocation0]]
  $region61: #{tpu_custom_call.1} parent=0
    _
  %s9 = ssub.s32 1, %s7
  %s10 = scalar_select 0, %s9, %s7
  loop: start=0, step=1, limit=4
  $region2: #{tpu_custom_call.1} parent=0 // loop_pre_header
    _
  $region3: #{tpu_custom_call.1} parent=0 // loop_header
    %s12 = sphi 0, %s16
    %p13 = scmp.ge.s32.totalorder %s12, 4
    %s22 = sphi 0, %s24
    %s25 = sphi 0, %s22
    %s26 = sphi 0, %s25
    %s42 = sphi 0, %s26
    %s46 = sphi 0, %s46
    %s48 = sphi 0, %s46
    %s49 = sphi 0, %s48
    %s63 = sphi 0, %s49
    %s67 = sphi 0, %s67
    %s69 = sphi 0, %s67
    %s70 = sphi 0, %s69
    %s84 = sphi 0, %s70
    %s90 = sphi 0, %s92
    %s93 = sphi 0, %s90
    %s94 = sphi 0, %s93
    %s110 = sphi 0, %s94
    %s116 = sphi 0, %s118
    %s119 = sphi 0, %s116
    %s120 = sphi 0, %s119
    %s136 = sphi 0, %s120
    %s142 = sphi 0, %s144
    %s145 = sphi 0, %s142
    %s146 = sphi 0, %s145
    %s162 = sphi 0, %s146
  $region4: #{tpu_custom_call.1} parent=0 // loop_header_branch
    %15 = sbr.rel (%p13) target = $region8
  $region5: #{tpu_custom_call.1} parent=0 // loop_body
    %s17 = ssub.s32 %s12, 1
    %s18 = ssub.s32 %s12, 2
    %s19 = sadd.s32 %s12, 1
    %s20 = ssub.s32 %s12, %s19
    %p21 = scmp.eq.s32.totalorder %s20, 0
    %s23 = sadd.s32 %s22, 1
    %s24 = scalar_select %p21, %s22, %s23
    %p27 = pneg %p21
    %p28 = scmp.eq.s32.totalorder %s12, 1
    %p29 = por %p27, %p28
    %p30 = scmp.ne.s32.totalorder %s22, %s25
    %p31 = scmp.eq.s32.totalorder %s12, 0
    %p32 = por %p30, %p31
    %p33 = scmp.ne.s32.totalorder %s22, %s25
    %p34 = scmp.eq.s32.totalorder %s17, 1
    %p35 = por %p33, %p34
    %p36 = scmp.ne.s32.totalorder %s25, %s26
    %p37 = scmp.eq.s32.totalorder %s17, 0
    %p38 = por %p36, %p37
    %p39 = scmp.ne.s32.totalorder %s25, %s26
    %p40 = scmp.eq.s32.totalorder %s18, 1
    %p41 = por %p39, %p40
    %p43 = scmp.ne.s32.totalorder %s26, %s42
    %p44 = scmp.eq.s32.totalorder %s18, 0
    %p45 = por %p43, %p44
    %s47 = sadd.s32 %s46, 1
    %p50 = scmp.eq.s32.totalorder %s12, 1
    %p51 = scmp.ne.s32.totalorder %s46, %s48
    %p52 = scmp.eq.s32.totalorder %s12, 0
    %p53 = por %p51, %p52
    %p54 = scmp.ne.s32.totalorder %s46, %s48
    %p55 = scmp.eq.s32.totalorder %s17, 1
    %p56 = por %p54, %p55
    %p57 = scmp.ne.s32.totalorder %s48, %s49
    %p58 = scmp.eq.s32.totalorder %s17, 0
    %p59 = por %p57, %p58
    %p60 = scmp.ne.s32.totalorder %s48, %s49
    %p61 = scmp.eq.s32.totalorder %s18, 1
    %p62 = por %p60, %p61
    %p64 = scmp.ne.s32.totalorder %s49, %s63
    %p65 = scmp.eq.s32.totalorder %s18, 0
    %p66 = por %p64, %p65
    %s68 = sadd.s32 %s67, 1
    %p71 = scmp.eq.s32.totalorder %s12, 1
    %p72 = scmp.ne.s32.totalorder %s67, %s69
    %p73 = scmp.eq.s32.totalorder %s12, 0
    %p74 = por %p72, %p73
    %p75 = scmp.ne.s32.totalorder %s67, %s69
    %p76 = scmp.eq.s32.totalorder %s17, 1
    %p77 = por %p75, %p76
    %p78 = scmp.ne.s32.totalorder %s69, %s70
    %p79 = scmp.eq.s32.totalorder %s17, 0
    %p80 = por %p78, %p79
    %p81 = scmp.ne.s32.totalorder %s69, %s70
    %p82 = scmp.eq.s32.totalorder %s18, 1
    %p83 = por %p81, %p82
    %p85 = scmp.ne.s32.totalorder %s70, %s84
    %p86 = scmp.eq.s32.totalorder %s18, 0
    %p87 = por %p85, %p86
    %s88 = ssub.s32 %s12, %s19
    %p89 = scmp.eq.s32.totalorder %s88, 0
    %s91 = sadd.s32 %s90, 1
    %s92 = scalar_select %p89, %s90, %s91
    %p95 = pneg %p89
    %p96 = scmp.eq.s32.totalorder %s12, 1
    %p97 = por %p95, %p96
    %p98 = scmp.ne.s32.totalorder %s90, %s93
    %p99 = scmp.eq.s32.totalorder %s12, 0
    %p100 = por %p98, %p99
    %p101 = scmp.ne.s32.totalorder %s90, %s93
    %p102 = scmp.eq.s32.totalorder %s17, 1
    %p103 = por %p101, %p102
    %p104 = scmp.ne.s32.totalorder %s93, %s94
    %p105 = scmp.eq.s32.totalorder %s17, 0
    %p106 = por %p104, %p105
    %p107 = scmp.ne.s32.totalorder %s93, %s94
    %p108 = scmp.eq.s32.totalorder %s18, 1
    %p109 = por %p107, %p108
    %p111 = scmp.ne.s32.totalorder %s94, %s110
    %p112 = scmp.eq.s32.totalorder %s18, 0
    %p113 = por %p111, %p112
    %s114 = ssub.s32 %s12, %s19
    %p115 = scmp.eq.s32.totalorder %s114, 0
    %s117 = sadd.s32 %s116, 1
    %s118 = scalar_select %p115, %s116, %s117
    %p121 = pneg %p115
    %p122 = scmp.eq.s32.totalorder %s12, 1
    %p123 = por %p121, %p122
    %p124 = scmp.ne.s32.totalorder %s116, %s119
    %p125 = scmp.eq.s32.totalorder %s12, 0
    %p126 = por %p124, %p125
    %p127 = scmp.ne.s32.totalorder %s116, %s119
    %p128 = scmp.eq.s32.totalorder %s17, 1
    %p129 = por %p127, %p128
    %p130 = scmp.ne.s32.totalorder %s119, %s120
    %p131 = scmp.eq.s32.totalorder %s17, 0
    %p132 = por %p130, %p131
    %p133 = scmp.ne.s32.totalorder %s119, %s120
    %p134 = scmp.eq.s32.totalorder %s18, 1
    %p135 = por %p133, %p134
    %p137 = scmp.ne.s32.totalorder %s120, %s136
    %p138 = scmp.eq.s32.totalorder %s18, 0
    %p139 = por %p137, %p138
    %s140 = ssub.s32 %s12, %s19
    %p141 = scmp.eq.s32.totalorder %s140, 0
    %s143 = sadd.s32 %s142, 1
    %s144 = scalar_select %p141, %s142, %s143
    %p147 = pneg %p141
    %p148 = scmp.eq.s32.totalorder %s12, 1
    %p149 = por %p147, %p148
    %p150 = scmp.ne.s32.totalorder %s142, %s145
    %p151 = scmp.eq.s32.totalorder %s12, 0
    %p152 = por %p150, %p151
    %p153 = scmp.ne.s32.totalorder %s142, %s145
    %p154 = scmp.eq.s32.totalorder %s17, 1
    %p155 = por %p153, %p154
    %p156 = scmp.ne.s32.totalorder %s145, %s146
    %p157 = scmp.eq.s32.totalorder %s17, 0
    %p158 = por %p156, %p157
    %p159 = scmp.ne.s32.totalorder %s145, %s146
    %p160 = scmp.eq.s32.totalorder %s18, 1
    %p161 = por %p159, %p160
    %p163 = scmp.ne.s32.totalorder %s146, %s162
    %p164 = scmp.eq.s32.totalorder %s18, 0
    %p165 = por %p163, %p164
    %p166 = scmp.le.s32.totalorder 1, %s12
    %p167 = scmp.lt.s32.totalorder %s12, 3
    %p168 = pnand %p166, %p167
    %p169 = pneg %p168
    // Predicated region
    $region9: #{tpu_custom_call.1} parent=5 // pred_check
      _
    $region10: #{tpu_custom_call.1} parent=5 // pred_check_branch
      %171 = sbr.rel (%p168) target = $region12
    $region11: #{tpu_custom_call.1} parent=5 // pred_region
      %s172 = ssub.s32 %s12, 1
      // Predicated region
      $region13: #{tpu_custom_call.1} parent=11 // pred_check
        %p173 = pneg %p59
      $region14: #{tpu_custom_call.1} parent=11 // pred_check_branch
        %175 = sbr.rel (%p173) target = $region16
      $region15: #{tpu_custom_call.1} parent=11 // pred_region
        _
      $region16: #{tpu_custom_call.1} parent=11 // pred_fallthru
        _
      // Predicated region
      $region17: #{tpu_custom_call.1} parent=11 // pred_check
        %p176 = pneg %p80
      $region18: #{tpu_custom_call.1} parent=11 // pred_check_branch
        %178 = sbr.rel (%p176) target = $region20
      $region19: #{tpu_custom_call.1} parent=11 // pred_region
        _
      $region20: #{tpu_custom_call.1} parent=11 // pred_fallthru
        _
    $region12: #{tpu_custom_call.1} parent=5 // pred_fallthru
      _
    %p179 = scmp.lt.s32.totalorder %s12, 2
    // Predicated region
    $region21: #{tpu_custom_call.1} parent=5 // pred_check
      %p180 = pneg %p179
    $region22: #{tpu_custom_call.1} parent=5 // pred_check_branch
      %182 = sbr.rel (%p180) target = $region24
    $region23: #{tpu_custom_call.1} parent=5 // pred_region
      // Predicated region
      $region25: #{tpu_custom_call.1} parent=23 // pred_check
        %p183 = pneg %p32
      $region26: #{tpu_custom_call.1} parent=23 // pred_check_branch
        %185 = sbr.rel (%p183) target = $region28
      $region27: #{tpu_custom_call.1} parent=23 // pred_region
        %s186 = smul.u32 36, %s12
        %p187 = scmp.lt.s32.totalorder %s186, 71
        %s188 = scalar_select %p187, %s186, 71
        %s189 = smul.addr %s188, 4
        %s190 = scalar_lea.vmem %s0, %s189
        %s191 = smul.u32 36, %s12
      $region28: #{tpu_custom_call.1} parent=23 // pred_fallthru
        _
    $region24: #{tpu_custom_call.1} parent=5 // pred_fallthru
      _
    %p192 = scmp.le.s32.totalorder 1, %s12
    %p193 = scmp.lt.s32.totalorder %s12, 3
    %p194 = pnand %p192, %p193
    %p195 = pneg %p194
    // Predicated region
    $region29: #{tpu_custom_call.1} parent=5 // pred_check
      _
    $region30: #{tpu_custom_call.1} parent=5 // pred_check_branch
      %197 = sbr.rel (%p194) target = $region32
    $region31: #{tpu_custom_call.1} parent=5 // pred_region
      %s198 = ssub.s32 %s12, 1
      %s199 = smul.u32 36, %s17
      %p200 = scmp.lt.s32.totalorder %s199, 71
      %s201 = scalar_select %p200, %s199, 71
      %s202 = smul.addr %s201, 4
      %s203 = scalar_lea.vmem %s0, %s202
      %p204 = pneg %p38
      %p205 = pneg %p35
      %p206 = pneg %p59
      %p207 = pneg %p56
      %p208 = pneg %p80
      %p209 = pneg %p77
      %p210 = pneg %p106
      %p211 = pneg %p103
      %s212 = smul.u32 36, %s17
      %p213 = scmp.lt.s32.totalorder %s212, 71
      %s214 = scalar_select %p213, %s212, 71
      %s215 = smul.addr %s214, 4
      %s216 = scalar_lea.vmem %s3, %s215
      %p217 = pneg %p132
      %p218 = pneg %p129
      %p219 = scmp.lt.s32.totalorder %s17, 1
      %s220 = scalar_select %p219, %s17, 1
      %s221 = smul.addr %s220, 8
      %s222 = scalar_lea.vmem %s4, %s221
      %p223 = pneg %p158
      %p224 = pneg %p155
      %p225 = scmp.lt.s32.totalorder %s17, 1
      %s226 = scalar_select %p225, %s17, 1
      %s227 = smul.addr %s226, 8
      %s228 = scalar_lea.vmem %s5, %s227
      %s229 = smul.u32 36, %s17
      %p230 = scmp.lt.s32.totalorder %s229, 71
      %s231 = scalar_select %p230, %s229, 71
      %s232 = smul.addr %s231, 4
      %s233 = scalar_lea.vmem %s0, %s232
      %s234 = smul.u32 36, %s17
      %s235 = smul.u32 36, %s17
      %p236 = scmp.lt.s32.totalorder %s235, 71
      %s237 = scalar_select %p236, %s235, 71
      %s238 = smul.addr %s237, 4
      %s239 = scalar_lea.vmem %s3, %s238
      %s240 = smul.u32 36, %s17
      %p241 = scmp.lt.s32.totalorder %s17, 1
      %s242 = scalar_select %p241, %s17, 1
      %s243 = smul.addr %s242, 8
      %s244 = scalar_lea.vmem %s4, %s243
      %p245 = scmp.lt.s32.totalorder %s17, 1
      %s246 = scalar_select %p245, %s17, 1
      %s247 = smul.addr %s246, 8
      %s248 = scalar_lea.vmem %s5, %s247
      %v250 = vld [vmem:[%s233] sm:$0xf]
      %v251 = vld [vmem:[%s233 + $0x4] sm:$0xf]
      %v252 = vld [vmem:[%s233 + $0x8] sm:$0xf]
      %v253 = vld [vmem:[%s233 + $0xc] sm:$0xf]
      %v254 = vld [vmem:[%s233 + $0x10] sm:$0xf]
      %v255 = vld [vmem:[%s233 + $0x14] sm:$0xf]
      %v256 = vld [vmem:[%s233 + $0x18] sm:$0xf]
      %v257 = vld [vmem:[%s233 + $0x1c] sm:$0xf]
      %v258 = vld [vmem:[%s233 + $0x20] sm:$0xf]
      %v259 = vld [vmem:[%s233 + $0x24] sm:$0xf]
      %v260 = vld [vmem:[%s233 + $0x28] sm:$0xf]
      %v261 = vld [vmem:[%s233 + $0x2c] sm:$0xf]
      %v262 = vld [vmem:[%s233 + $0x30] sm:$0xf]
      %v263 = vld [vmem:[%s233 + $0x34] sm:$0xf]
      %v264 = vld [vmem:[%s233 + $0x38] sm:$0xf]
      %v265 = vld [vmem:[%s233 + $0x3c] sm:$0xf]
      %v266 = vld [vmem:[%s233 + $0x40] sm:$0xf]
      %v267 = vld [vmem:[%s233 + $0x44] sm:$0xf]
      %v268 = vld [vmem:[%s233 + $0x48] sm:$0xf]
      %v269 = vld [vmem:[%s233 + $0x4c] sm:$0xf]
      %v270 = vld [vmem:[%s233 + $0x50] sm:$0xf]
      %v271 = vld [vmem:[%s233 + $0x54] sm:$0xf]
      %v272 = vld [vmem:[%s233 + $0x58] sm:$0xf]
      %v273 = vld [vmem:[%s233 + $0x5c] sm:$0xf]
      %v274 = vld [vmem:[%s233 + $0x60] sm:$0xf]
      %v275 = vld [vmem:[%s233 + $0x64] sm:$0xf]
      %v276 = vld [vmem:[%s233 + $0x68] sm:$0xf]
      %v277 = vld [vmem:[%s233 + $0x6c] sm:$0xf]
      %v278 = vld [vmem:[%s233 + $0x70] sm:$0xf]
      %v279 = vld [vmem:[%s233 + $0x74] sm:$0xf]
      %v280 = vld [vmem:[%s233 + $0x78] sm:$0xf]
      %v281 = vld [vmem:[%s233 + $0x7c] sm:$0xf]
      %v282 = vld [vmem:[%s233 + $0x80] sm:$0xf]
      %v283 = vld [vmem:[%s233 + $0x84] sm:$0xf]
      %v284 = vld [vmem:[%s233 + $0x88] sm:$0xf]
      %v285 = vld [vmem:[%s233 + $0x8c] sm:$0x7]
      %v286 = vld [vmem:[%s1] sm:$0xf]
      %v287 = vld [vmem:[%s1 + $0x4] sm:$0x3]
      %v288 = vld [vmem:[%s233 + $0x8c] sm:$0xf]
      %s289 = scalar_lea.vmem %s1, 8
      %v290 = vld [vmem:[%s289] sm:$0xf]
      %v291 = vld [vmem:[%s289 + $0x4] sm:$0x3]
      %v328 = vunpack.c.l.b16 %v250
      %v329 = vunpack.c.l.b16 %v251
      %v330 = vunpack.c.l.b16 %v252
      %v331 = vunpack.c.l.b16 %v253
      %v332 = vunpack.c.l.b16 %v254
      %v333 = vunpack.c.l.b16 %v255
      %v334 = vunpack.c.l.b16 %v256
      %v335 = vunpack.c.l.b16 %v257
      %v336 = vunpack.c.l.b16 %v258
      %v337 = vunpack.c.l.b16 %v259
      %v338 = vunpack.c.l.b16 %v260
      %v339 = vunpack.c.l.b16 %v261
      %v340 = vunpack.c.l.b16 %v262
      %v341 = vunpack.c.l.b16 %v263
      %v342 = vunpack.c.l.b16 %v264
      %v343 = vunpack.c.l.b16 %v265
      %v344 = vunpack.c.l.b16 %v266
      %v345 = vunpack.c.l.b16 %v267
      %v346 = vunpack.c.l.b16 %v268
      %v347 = vunpack.c.l.b16 %v269
      %v348 = vunpack.c.l.b16 %v270
      %v349 = vunpack.c.l.b16 %v271
      %v350 = vunpack.c.l.b16 %v272
      %v351 = vunpack.c.l.b16 %v273
      %v352 = vunpack.c.l.b16 %v274
      %v353 = vunpack.c.l.b16 %v275
      %v354 = vunpack.c.l.b16 %v276
      %v355 = vunpack.c.l.b16 %v277
      %v356 = vunpack.c.l.b16 %v278
      %v357 = vunpack.c.l.b16 %v279
      %v358 = vunpack.c.l.b16 %v280
      %v359 = vunpack.c.l.b16 %v281
      %v360 = vunpack.c.l.b16 %v282
      %v361 = vunpack.c.l.b16 %v283
      %v362 = vunpack.c.l.b16 %v284
      %v363 = vunpack.c.l.b16 %v288
      %v364 = vpack.c.b16 %v329, %v328
      %v365 = vpack.c.b16 %v331, %v330
      %v366 = vpack.c.b16 %v333, %v332
      %v367 = vpack.c.b16 %v335, %v334
      %v368 = vpack.c.b16 %v337, %v336
      %v369 = vpack.c.b16 %v339, %v338
      %v370 = vpack.c.b16 %v341, %v340
      %v371 = vpack.c.b16 %v343, %v342
      %v372 = vpack.c.b16 %v345, %v344
      %v373 = vpack.c.b16 %v347, %v346
      %v374 = vpack.c.b16 %v349, %v348
      %v375 = vpack.c.b16 %v351, %v350
      %v376 = vpack.c.b16 %v353, %v352
      %v377 = vpack.c.b16 %v355, %v354
      %v378 = vpack.c.b16 %v357, %v356
      %v379 = vpack.c.b16 %v359, %v358
      %v380 = vpack.c.b16 %v361, %v360
      %v381 = vpack.c.b16 %v363, %v362
      %vm382 = vsmask.f32 7424
      %v384 = vshrl.u32 %v364, 16
      %v386 = vshll.u32 %v364, 16
      %v388 = vrot.slane %v386, 1
      %v389 = vor.u32 %v384, %v388
      %v391 = vshll.u32 %v365, 16
      %v393 = vrot.slane %v391, 1
      %v394 = vsel %vm382, %v389, %v393
      %v395 = vshrl.u32 %v365, 16
      %v397 = vor.u32 %v395, %v393
      %v399 = vshll.u32 %v366, 16
      %v401 = vrot.slane %v399, 1
      %v402 = vsel %vm382, %v397, %v401
      %v403 = vshrl.u32 %v366, 16
      %v405 = vor.u32 %v403, %v401
      %v407 = vshll.u32 %v367, 16
      %v409 = vrot.slane %v407, 1
      %v410 = vsel %vm382, %v405, %v409
      %v411 = vshrl.u32 %v367, 16
      %v413 = vor.u32 %v411, %v409
      %v415 = vshll.u32 %v368, 16
      %v417 = vrot.slane %v415, 1
      %v418 = vsel %vm382, %v413, %v417
      %v419 = vshrl.u32 %v368, 16
      %v421 = vor.u32 %v419, %v417
      %v423 = vshll.u32 %v369, 16
      %v425 = vrot.slane %v423, 1
      %v426 = vsel %vm382, %v421, %v425
      %v427 = vshrl.u32 %v369, 16
      %v429 = vor.u32 %v427, %v425
      %v431 = vshll.u32 %v370, 16
      %v433 = vrot.slane %v431, 1
      %v434 = vsel %vm382, %v429, %v433
      %v435 = vshrl.u32 %v370, 16
      %v437 = vor.u32 %v435, %v433
      %v439 = vshll.u32 %v371, 16
      %v441 = vrot.slane %v439, 1
      %v442 = vsel %vm382, %v437, %v441
      %v443 = vshrl.u32 %v371, 16
      %v445 = vor.u32 %v443, %v441
      %v447 = vshll.u32 %v372, 16
      %v449 = vrot.slane %v447, 1
      %v450 = vsel %vm382, %v445, %v449
      %v451 = vshrl.u32 %v372, 16
      %v453 = vor.u32 %v451, %v449
      %v455 = vshll.u32 %v373, 16
      %v457 = vrot.slane %v455, 1
      %v458 = vsel %vm382, %v453, %v457
      %v459 = vshrl.u32 %v373, 16
      %v461 = vor.u32 %v459, %v457
      %v463 = vshll.u32 %v374, 16
      %v465 = vrot.slane %v463, 1
      %v466 = vsel %vm382, %v461, %v465
      %v467 = vshrl.u32 %v374, 16
      %v469 = vor.u32 %v467, %v465
      %v471 = vshll.u32 %v375, 16
      %v473 = vrot.slane %v471, 1
      %v474 = vsel %vm382, %v469, %v473
      %v475 = vshrl.u32 %v375, 16
      %v477 = vor.u32 %v475, %v473
      %v479 = vshll.u32 %v376, 16
      %v481 = vrot.slane %v479, 1
      %v482 = vsel %vm382, %v477, %v481
      %v483 = vshrl.u32 %v376, 16
      %v485 = vor.u32 %v483, %v481
      %v487 = vshll.u32 %v377, 16
      %v489 = vrot.slane %v487, 1
      %v490 = vsel %vm382, %v485, %v489
      %v491 = vshrl.u32 %v377, 16
      %v493 = vor.u32 %v491, %v489
      %v495 = vshll.u32 %v378, 16
      %v497 = vrot.slane %v495, 1
      %v498 = vsel %vm382, %v493, %v497
      %v499 = vshrl.u32 %v378, 16
      %v501 = vor.u32 %v499, %v497
      %v503 = vshll.u32 %v379, 16
      %v505 = vrot.slane %v503, 1
      %v506 = vsel %vm382, %v501, %v505
      %v507 = vshrl.u32 %v379, 16
      %v509 = vor.u32 %v507, %v505
      %v511 = vshll.u32 %v380, 16
      %v513 = vrot.slane %v511, 1
      %v514 = vsel %vm382, %v509, %v513
      %v515 = vshrl.u32 %v380, 16
      %v517 = vor.u32 %v515, %v513
      %v519 = vshll.u32 %v381, 16
      %v521 = vrot.slane %v519, 1
      %v522 = vsel %vm382, %v517, %v521
      %v523 = vshrl.u32 %v381, 16
      %v525 = vor.u32 %v523, %v521
      %v528 = vunpack.c.l.b16 %v290
      %v529 = vunpack.c.l.b16 %v291
      %v530 = vpack.c.b16 %v529, %v528
      %vm531 = vcmask 97280
      %v533 = vsel %vm531, %v394, 0
      %v536 = vsel %vm531, %v402, 0
      %v539 = vsel %vm531, %v410, 0
      %v542 = vsel %vm531, %v418, 0
      %v545 = vsel %vm531, %v426, 0
      %v548 = vsel %vm531, %v434, 0
      %v551 = vsel %vm531, %v442, 0
      %v554 = vsel %vm531, %v450, 0
      %v557 = vsel %vm531, %v458, 0
      %v560 = vsel %vm531, %v466, 0
      %v563 = vsel %vm531, %v474, 0
      %v566 = vsel %vm531, %v482, 0
      %v569 = vsel %vm531, %v490, 0
      %v572 = vsel %vm531, %v498, 0
      %v575 = vsel %vm531, %v506, 0
      %v578 = vsel %vm531, %v514, 0
      %v581 = vsel %vm531, %v522, 0
      %v584 = vsel %vm531, %v525, 0
      %vm586 = vcmask 1045504
      %v588 = vsel %vm586, %v530, 0
      %590 = vmatprep.subr.bf16.mxu0 0
      %591 = vmatpush1.bf16.msra.mxu0 0
      %592 = vmatprep.subr.bf16.mxu0 0
      %593 = vmatpush1.bf16.msra.mxu0 0
      %594 = vmatprep.subr.bf16.mxu0 0
      %595 = vmatpush1.bf16.msra.mxu0 0
      %596 = vmatprep.subr.bf16.mxu0 0
      %597 = vmatpush1.bf16.msra.mxu0 0
      %598 = vmatprep.subr.bf16.mxu0 0
      %599 = vmatpush1.bf16.msra.mxu0 0
      %600 = vmatprep.subr.bf16.mxu0 0
      %601 = vmatpush1.bf16.msra.mxu0 0
      %602 = vmatprep.subr.bf16.mxu0 0
      %603 = vmatpush1.bf16.msra.mxu0 0
      %604 = vmatprep.subr.bf16.mxu0 0
      %605 = vmatpush1.bf16.msra.mxu0 %v588
      %606 = vmatprep.subr.bf16.mxu0 0
      %607 = vmatpush2.bf16.msra.mxu0 0
      %608 = vmatprep.subr.bf16.mxu0 0
      %609 = vmatpush2.bf16.msra.mxu0 0
      %610 = vmatprep.subr.bf16.mxu0 0
      %611 = vmatpush2.bf16.msra.mxu0 0
      %612 = vmatprep.subr.bf16.mxu0 0
      %613 = vmatpush2.bf16.msra.mxu0 0
      %614 = vmatprep.subr.bf16.mxu0 0
      %615 = vmatpush2.bf16.msra.mxu0 0
      %616 = vmatprep.subr.bf16.mxu0 0
      %617 = vmatpush2.bf16.msra.mxu0 0
      %618 = vmatprep.subr.bf16.mxu0 0
      %619 = vmatpush2.bf16.msra.mxu0 0
      %620 = vmatprep.subr.bf16.mxu0 0
      %621 = vmatpush2.bf16.msra.mxu0 0
      %622 = vmatprep.mubr.bf16.mxu0 0
      %623 = vmatmul.mubr.bf16.gmra.mxu0 %v533
      %v624 = vpop.f32.mrf.mxu0
      %v625 = vadd.f32 0.0, %v624
      %v626 = vpop.f32.mrf.mxu0
      %v627 = vpop.f32.mrf.mxu0
      %v628 = vadd.f32 0.0, %v627
      %v629 = vpop.f32.mrf.mxu0
      %630 = vmatprep.mubr.bf16.mxu0 0
      %631 = vmatmul.mubr.bf16.gmra.mxu0 %v536
      %v632 = vpop.f32.mrf.mxu0
      %v633 = vadd.f32 0.0, %v632
      %v634 = vpop.f32.mrf.mxu0
      %v635 = vpop.f32.mrf.mxu0
      %v636 = vadd.f32 0.0, %v635
      %v637 = vpop.f32.mrf.mxu0
      %638 = vmatprep.mubr.bf16.mxu0 0
      %639 = vmatmul.mubr.bf16.gmra.mxu0 %v539
      %v640 = vpop.f32.mrf.mxu0
      %v641 = vadd.f32 0.0, %v640
      %v642 = vpop.f32.mrf.mxu0
      %v643 = vpop.f32.mrf.mxu0
      %v644 = vadd.f32 0.0, %v643
      %v645 = vpop.f32.mrf.mxu0
      %646 = vmatprep.mubr.bf16.mxu0 0
      %647 = vmatmul.mubr.bf16.gmra.mxu0 %v542
      %v648 = vpop.f32.mrf.mxu0
      %v649 = vadd.f32 0.0, %v648
      %v650 = vpop.f32.mrf.mxu0
      %v651 = vpop.f32.mrf.mxu0
      %v652 = vadd.f32 0.0, %v651
      %v653 = vpop.f32.mrf.mxu0
      %654 = vmatprep.mubr.bf16.mxu0 0
      %655 = vmatmul.mubr.bf16.gmra.mxu0 %v545
      %v656 = vpop.f32.mrf.mxu0
      %v657 = vadd.f32 0.0, %v656
      %v658 = vpop.f32.mrf.mxu0
      %v659 = vpop.f32.mrf.mxu0
      %v660 = vadd.f32 0.0, %v659
      %v661 = vpop.f32.mrf.mxu0
      %662 = vmatprep.mubr.bf16.mxu0 0
      %663 = vmatmul.mubr.bf16.gmra.mxu0 %v548
      %v664 = vpop.f32.mrf.mxu0
      %v665 = vadd.f32 0.0, %v664
      %v666 = vpop.f32.mrf.mxu0
      %v667 = vpop.f32.mrf.mxu0
      %v668 = vadd.f32 0.0, %v667
      %v669 = vpop.f32.mrf.mxu0
      %670 = vmatprep.mubr.bf16.mxu0 0
      %671 = vmatmul.mubr.bf16.gmra.mxu0 %v551
      %v672 = vpop.f32.mrf.mxu0
      %v673 = vadd.f32 0.0, %v672
      %v674 = vpop.f32.mrf.mxu0
      %v675 = vpop.f32.mrf.mxu0
      %v676 = vadd.f32 0.0, %v675
      %v677 = vpop.f32.mrf.mxu0
      %678 = vmatprep.mubr.bf16.mxu0 0
      %679 = vmatmul.mubr.bf16.gmra.mxu0 %v554
      %v680 = vpop.f32.mrf.mxu0
      %v681 = vadd.f32 0.0, %v680
      %v682 = vpop.f32.mrf.mxu0
      %v683 = vpop.f32.mrf.mxu0
      %v684 = vadd.f32 0.0, %v683
      %v685 = vpop.f32.mrf.mxu0
      %686 = vmatprep.mubr.bf16.mxu0 0
      %687 = vmatmul.mubr.bf16.gmra.mxu0 %v557
      %v688 = vpop.f32.mrf.mxu0
      %v689 = vadd.f32 0.0, %v688
      %v690 = vpop.f32.mrf.mxu0
      %v691 = vpop.f32.mrf.mxu0
      %v692 = vadd.f32 0.0, %v691
      %v693 = vpop.f32.mrf.mxu0
      %694 = vmatprep.mubr.bf16.mxu0 0
      %695 = vmatmul.mubr.bf16.gmra.mxu0 %v560
      %v696 = vpop.f32.mrf.mxu0
      %v697 = vadd.f32 0.0, %v696
      %v698 = vpop.f32.mrf.mxu0
      %v699 = vpop.f32.mrf.mxu0
      %v700 = vadd.f32 0.0, %v699
      %v701 = vpop.f32.mrf.mxu0
      %702 = vmatprep.mubr.bf16.mxu0 0
      %703 = vmatmul.mubr.bf16.gmra.mxu0 %v563
      %v704 = vpop.f32.mrf.mxu0
      %v705 = vadd.f32 0.0, %v704
      %v706 = vpop.f32.mrf.mxu0
      %v707 = vpop.f32.mrf.mxu0
      %v708 = vadd.f32 0.0, %v707
      %v709 = vpop.f32.mrf.mxu0
      %710 = vmatprep.mubr.bf16.mxu0 0
      %711 = vmatmul.mubr.bf16.gmra.mxu0 %v566
      %v712 = vpop.f32.mrf.mxu0
      %v713 = vadd.f32 0.0, %v712
      %v714 = vpop.f32.mrf.mxu0
      %v715 = vpop.f32.mrf.mxu0
      %v716 = vadd.f32 0.0, %v715
      %v717 = vpop.f32.mrf.mxu0
      %718 = vmatprep.mubr.bf16.mxu0 0
      %719 = vmatmul.mubr.bf16.gmra.mxu0 %v569
      %v720 = vpop.f32.mrf.mxu0
      %v721 = vadd.f32 0.0, %v720
      %v722 = vpop.f32.mrf.mxu0
      %v723 = vpop.f32.mrf.mxu0
      %v724 = vadd.f32 0.0, %v723
      %v725 = vpop.f32.mrf.mxu0
      %726 = vmatprep.mubr.bf16.mxu0 0
      %727 = vmatmul.mubr.bf16.gmra.mxu0 %v572
      %v728 = vpop.f32.mrf.mxu0
      %v729 = vadd.f32 0.0, %v728
      %v730 = vpop.f32.mrf.mxu0
      %v731 = vpop.f32.mrf.mxu0
      %v732 = vadd.f32 0.0, %v731
      %v733 = vpop.f32.mrf.mxu0
      %734 = vmatprep.mubr.bf16.mxu0 0
      %735 = vmatmul.mubr.bf16.gmra.mxu0 %v575
      %v736 = vpop.f32.mrf.mxu0
      %v737 = vadd.f32 0.0, %v736
      %v738 = vpop.f32.mrf.mxu0
      %v739 = vpop.f32.mrf.mxu0
      %v740 = vadd.f32 0.0, %v739
      %v741 = vpop.f32.mrf.mxu0
      %742 = vmatprep.mubr.bf16.mxu0 0
      %743 = vmatmul.mubr.bf16.gmra.mxu0 %v578
      %v744 = vpop.f32.mrf.mxu0
      %v745 = vadd.f32 0.0, %v744
      %v746 = vpop.f32.mrf.mxu0
      %v747 = vpop.f32.mrf.mxu0
      %v748 = vadd.f32 0.0, %v747
      %v749 = vpop.f32.mrf.mxu0
      %750 = vmatprep.mubr.bf16.mxu0 0
      %751 = vmatmul.mubr.bf16.gmra.mxu0 %v581
      %v752 = vpop.f32.mrf.mxu0
      %v753 = vadd.f32 0.0, %v752
      %v754 = vpop.f32.mrf.mxu0
      %v755 = vpop.f32.mrf.mxu0
      %v756 = vadd.f32 0.0, %v755
      %v757 = vpop.f32.mrf.mxu0
      %758 = vmatprep.mubr.bf16.mxu0 0
      %759 = vmatmul.mubr.bf16.gmra.mxu0 %v584
      %v760 = vpop.f32.mrf.mxu0
      %v761 = vadd.f32 0.0, %v760
      %v762 = vpop.f32.mrf.mxu0
      %v763 = vpop.f32.mrf.mxu0
      %v764 = vadd.f32 0.0, %v763
      %v765 = vpop.f32.mrf.mxu0
      %766 = vdwg.mxu0
      %v768 = vunpack.c.l.b16 %v285
      %v769 = vpack.c.b16 %v768, %v362
      %v772 = vunpack.c.l.b16 %v286
      %v773 = vunpack.c.l.b16 %v287
      %v774 = vpack.c.b16 %v773, %v772
      %v775 = vsel %vm531, %v364, 0
      %v777 = vsel %vm531, %v365, 0
      %v779 = vsel %vm531, %v366, 0
      %v781 = vsel %vm531, %v367, 0
      %v783 = vsel %vm531, %v368, 0
      %v785 = vsel %vm531, %v369, 0
      %v787 = vsel %vm531, %v370, 0
      %v789 = vsel %vm531, %v371, 0
      %v791 = vsel %vm531, %v372, 0
      %v793 = vsel %vm531, %v373, 0
      %v795 = vsel %vm531, %v374, 0
      %v797 = vsel %vm531, %v375, 0
      %v799 = vsel %vm531, %v376, 0
      %v801 = vsel %vm531, %v377, 0
      %v803 = vsel %vm531, %v378, 0
      %v805 = vsel %vm531, %v379, 0
      %v807 = vsel %vm531, %v380, 0
      %v810 = vsel %vm531, %v769, 0
      %v813 = vsel %vm586, %v774, 0
      %815 = vmatprep.subr.bf16.mxu0 0
      %816 = vmatpush1.bf16.msra.mxu0 0
      %817 = vmatprep.subr.bf16.mxu0 0
      %818 = vmatpush1.bf16.msra.mxu0 0
      %819 = vmatprep.subr.bf16.mxu0 0
      %820 = vmatpush1.bf16.msra.mxu0 0
      %821 = vmatprep.subr.bf16.mxu0 0
      %822 = vmatpush1.bf16.msra.mxu0 0
      %823 = vmatprep.subr.bf16.mxu0 0
      %824 = vmatpush1.bf16.msra.mxu0 0
      %825 = vmatprep.subr.bf16.mxu0 0
      %826 = vmatpush1.bf16.msra.mxu0 0
      %827 = vmatprep.subr.bf16.mxu0 0
      %828 = vmatpush1.bf16.msra.mxu0 0
      %829 = vmatprep.subr.bf16.mxu0 0
      %830 = vmatpush1.bf16.msra.mxu0 %v813
      %831 = vmatprep.subr.bf16.mxu0 0
      %832 = vmatpush2.bf16.msra.mxu0 0
      %833 = vmatprep.subr.bf16.mxu0 0
      %834 = vmatpush2.bf16.msra.mxu0 0
      %835 = vmatprep.subr.bf16.mxu0 0
      %836 = vmatpush2.bf16.msra.mxu0 0
      %837 = vmatprep.subr.bf16.mxu0 0
      %838 = vmatpush2.bf16.msra.mxu0 0
      %839 = vmatprep.subr.bf16.mxu0 0
      %840 = vmatpush2.bf16.msra.mxu0 0
      %841 = vmatprep.subr.bf16.mxu0 0
      %842 = vmatpush2.bf16.msra.mxu0 0
      %843 = vmatprep.subr.bf16.mxu0 0
      %844 = vmatpush2.bf16.msra.mxu0 0
      %845 = vmatprep.subr.bf16.mxu0 0
      %846 = vmatpush2.bf16.msra.mxu0 0
      %847 = vmatprep.mubr.bf16.mxu0 0
      %848 = vmatmul.mubr.bf16.gmra.mxu0 %v775
      %v849 = vpop.f32.mrf.mxu0
      %v850 = vadd.f32 %v625, %v849
      %v851 = vpop.f32.mrf.mxu0
      %v852 = vpop.f32.mrf.mxu0
      %v853 = vadd.f32 %v628, %v852
      %v854 = vpop.f32.mrf.mxu0
      %855 = vmatprep.mubr.bf16.mxu0 0
      %856 = vmatmul.mubr.bf16.gmra.mxu0 %v777
      %v857 = vpop.f32.mrf.mxu0
      %v858 = vadd.f32 %v633, %v857
      %v859 = vpop.f32.mrf.mxu0
      %v860 = vpop.f32.mrf.mxu0
      %v861 = vadd.f32 %v636, %v860
      %v862 = vpop.f32.mrf.mxu0
      %863 = vmatprep.mubr.bf16.mxu0 0
      %864 = vmatmul.mubr.bf16.gmra.mxu0 %v779
      %v865 = vpop.f32.mrf.mxu0
      %v866 = vadd.f32 %v641, %v865
      %v867 = vpop.f32.mrf.mxu0
      %v868 = vpop.f32.mrf.mxu0
      %v869 = vadd.f32 %v644, %v868
      %v870 = vpop.f32.mrf.mxu0
      %871 = vmatprep.mubr.bf16.mxu0 0
      %872 = vmatmul.mubr.bf16.gmra.mxu0 %v781
      %v873 = vpop.f32.mrf.mxu0
      %v874 = vadd.f32 %v649, %v873
      %v875 = vpop.f32.mrf.mxu0
      %v876 = vpop.f32.mrf.mxu0
      %v877 = vadd.f32 %v652, %v876
      %v878 = vpop.f32.mrf.mxu0
      %879 = vmatprep.mubr.bf16.mxu0 0
      %880 = vmatmul.mubr.bf16.gmra.mxu0 %v783
      %v881 = vpop.f32.mrf.mxu0
      %v882 = vadd.f32 %v657, %v881
      %v883 = vpop.f32.mrf.mxu0
      %v884 = vpop.f32.mrf.mxu0
      %v885 = vadd.f32 %v660, %v884
      %v886 = vpop.f32.mrf.mxu0
      %887 = vmatprep.mubr.bf16.mxu0 0
      %888 = vmatmul.mubr.bf16.gmra.mxu0 %v785
      %v889 = vpop.f32.mrf.mxu0
      %v890 = vadd.f32 %v665, %v889
      %v891 = vpop.f32.mrf.mxu0
      %v892 = vpop.f32.mrf.mxu0
      %v893 = vadd.f32 %v668, %v892
      %v894 = vpop.f32.mrf.mxu0
      %895 = vmatprep.mubr.bf16.mxu0 0
      %896 = vmatmul.mubr.bf16.gmra.mxu0 %v787
      %v897 = vpop.f32.mrf.mxu0
      %v898 = vadd.f32 %v673, %v897
      %v899 = vpop.f32.mrf.mxu0
      %v900 = vpop.f32.mrf.mxu0
      %v901 = vadd.f32 %v676, %v900
      %v902 = vpop.f32.mrf.mxu0
      %903 = vmatprep.mubr.bf16.mxu0 0
      %904 = vmatmul.mubr.bf16.gmra.mxu0 %v789
      %v905 = vpop.f32.mrf.mxu0
      %v906 = vadd.f32 %v681, %v905
      %v907 = vpop.f32.mrf.mxu0
      %v908 = vpop.f32.mrf.mxu0
      %v909 = vadd.f32 %v684, %v908
      %v910 = vpop.f32.mrf.mxu0
      %911 = vmatprep.mubr.bf16.mxu0 0
      %912 = vmatmul.mubr.bf16.gmra.mxu0 %v791
      %v913 = vpop.f32.mrf.mxu0
      %v914 = vadd.f32 %v689, %v913
      %v915 = vpop.f32.mrf.mxu0
      %v916 = vpop.f32.mrf.mxu0
      %v917 = vadd.f32 %v692, %v916
      %v918 = vpop.f32.mrf.mxu0
      %919 = vmatprep.mubr.bf16.mxu0 0
      %920 = vmatmul.mubr.bf16.gmra.mxu0 %v793
      %v921 = vpop.f32.mrf.mxu0
      %v922 = vadd.f32 %v697, %v921
      %v923 = vpop.f32.mrf.mxu0
      %v924 = vpop.f32.mrf.mxu0
      %v925 = vadd.f32 %v700, %v924
      %v926 = vpop.f32.mrf.mxu0
      %927 = vmatprep.mubr.bf16.mxu0 0
      %928 = vmatmul.mubr.bf16.gmra.mxu0 %v795
      %v929 = vpop.f32.mrf.mxu0
      %v930 = vadd.f32 %v705, %v929
      %v931 = vpop.f32.mrf.mxu0
      %v932 = vpop.f32.mrf.mxu0
      %v933 = vadd.f32 %v708, %v932
      %v934 = vpop.f32.mrf.mxu0
      %935 = vmatprep.mubr.bf16.mxu0 0
      %936 = vmatmul.mubr.bf16.gmra.mxu0 %v797
      %v937 = vpop.f32.mrf.mxu0
      %v938 = vadd.f32 %v713, %v937
      %v939 = vpop.f32.mrf.mxu0
      %v940 = vpop.f32.mrf.mxu0
      %v941 = vadd.f32 %v716, %v940
      %v942 = vpop.f32.mrf.mxu0
      %943 = vmatprep.mubr.bf16.mxu0 0
      %944 = vmatmul.mubr.bf16.gmra.mxu0 %v799
      %v945 = vpop.f32.mrf.mxu0
      %v946 = vadd.f32 %v721, %v945
      %v947 = vpop.f32.mrf.mxu0
      %v948 = vpop.f32.mrf.mxu0
      %v949 = vadd.f32 %v724, %v948
      %v950 = vpop.f32.mrf.mxu0
      %951 = vmatprep.mubr.bf16.mxu0 0
      %952 = vmatmul.mubr.bf16.gmra.mxu0 %v801
      %v953 = vpop.f32.mrf.mxu0
      %v954 = vadd.f32 %v729, %v953
      %v955 = vpop.f32.mrf.mxu0
      %v956 = vpop.f32.mrf.mxu0
      %v957 = vadd.f32 %v732, %v956
      %v958 = vpop.f32.mrf.mxu0
      %959 = vmatprep.mubr.bf16.mxu0 0
      %960 = vmatmul.mubr.bf16.gmra.mxu0 %v803
      %v961 = vpop.f32.mrf.mxu0
      %v962 = vadd.f32 %v737, %v961
      %v963 = vpop.f32.mrf.mxu0
      %v964 = vpop.f32.mrf.mxu0
      %v965 = vadd.f32 %v740, %v964
      %v966 = vpop.f32.mrf.mxu0
      %967 = vmatprep.mubr.bf16.mxu0 0
      %968 = vmatmul.mubr.bf16.gmra.mxu0 %v805
      %v969 = vpop.f32.mrf.mxu0
      %v970 = vadd.f32 %v745, %v969
      %v971 = vpop.f32.mrf.mxu0
      %v972 = vpop.f32.mrf.mxu0
      %v973 = vadd.f32 %v748, %v972
      %v974 = vpop.f32.mrf.mxu0
      %975 = vmatprep.mubr.bf16.mxu0 0
      %976 = vmatmul.mubr.bf16.gmra.mxu0 %v807
      %v977 = vpop.f32.mrf.mxu0
      %v978 = vadd.f32 %v753, %v977
      %v979 = vpop.f32.mrf.mxu0
      %v980 = vpop.f32.mrf.mxu0
      %v981 = vadd.f32 %v756, %v980
      %v982 = vpop.f32.mrf.mxu0
      %983 = vmatprep.mubr.bf16.mxu0 0
      %984 = vmatmul.mubr.bf16.gmra.mxu0 %v810
      %v985 = vpop.f32.mrf.mxu0
      %v986 = vadd.f32 %v761, %v985
      %v987 = vpop.f32.mrf.mxu0
      %v988 = vpop.f32.mrf.mxu0
      %v989 = vadd.f32 %v764, %v988
      %v990 = vpop.f32.mrf.mxu0
      %991 = vdwg.mxu0
      %v992 = vld [vmem:[%s233] sm:$0xe]
      %s993 = scalar_lea.vmem %s1, 16
      %v994 = vld [vmem:[%s993] sm:$0xf]
      %v995 = vld [vmem:[%s993 + $0x4] sm:$0x3]
      %v997 = vunpack.c.l.b16 %v992
      %v998 = vpack.c.b16 %v329, %v997
      %vm999 = vcmask 1046528
      %v1000 = vrot.slane %v998, 1
      %v1001 = vrot.slane %v365, 1
      %v1002 = vsel %vm999, %v1000, %v1001
      %v1003 = vrot.slane %v366, 1
      %v1004 = vsel %vm999, %v1001, %v1003
      %v1005 = vrot.slane %v367, 1
      %v1006 = vsel %vm999, %v1003, %v1005
      %v1007 = vrot.slane %v368, 1
      %v1008 = vsel %vm999, %v1005, %v1007
      %v1009 = vrot.slane %v369, 1
      %v1010 = vsel %vm999, %v1007, %v1009
      %v1011 = vrot.slane %v370, 1
      %v1012 = vsel %vm999, %v1009, %v1011
      %v1013 = vrot.slane %v371, 1
      %v1014 = vsel %vm999, %v1011, %v1013
      %v1015 = vrot.slane %v372, 1
      %v1016 = vsel %vm999, %v1013, %v1015
      %v1017 = vrot.slane %v373, 1
      %v1018 = vsel %vm999, %v1015, %v1017
      %v1019 = vrot.slane %v374, 1
      %v1020 = vsel %vm999, %v1017, %v1019
      %v1021 = vrot.slane %v375, 1
      %v1022 = vsel %vm999, %v1019, %v1021
      %v1023 = vrot.slane %v376, 1
      %v1024 = vsel %vm999, %v1021, %v1023
      %v1025 = vrot.slane %v377, 1
      %v1026 = vsel %vm999, %v1023, %v1025
      %v1027 = vrot.slane %v378, 1
      %v1028 = vsel %vm999, %v1025, %v1027
      %v1029 = vrot.slane %v379, 1
      %v1030 = vsel %vm999, %v1027, %v1029
      %v1031 = vrot.slane %v380, 1
      %v1032 = vsel %vm999, %v1029, %v1031
      %v1033 = vrot.slane %v381, 1
      %v1034 = vsel %vm999, %v1031, %v1033
      %v1037 = vunpack.c.l.b16 %v994
      %v1038 = vunpack.c.l.b16 %v995
      %v1039 = vpack.c.b16 %v1038, %v1037
      %v1041 = vsel %vm531, %v1002, 0
      %v1044 = vsel %vm531, %v1004, 0
      %v1047 = vsel %vm531, %v1006, 0
      %v1050 = vsel %vm531, %v1008, 0
      %v1053 = vsel %vm531, %v1010, 0
      %v1056 = vsel %vm531, %v1012, 0
      %v1059 = vsel %vm531, %v1014, 0
      %v1062 = vsel %vm531, %v1016, 0
      %v1065 = vsel %vm531, %v1018, 0
      %v1068 = vsel %vm531, %v1020, 0
      %v1071 = vsel %vm531, %v1022, 0
      %v1074 = vsel %vm531, %v1024, 0
      %v1077 = vsel %vm531, %v1026, 0
      %v1080 = vsel %vm531, %v1028, 0
      %v1083 = vsel %vm531, %v1030, 0
      %v1086 = vsel %vm531, %v1032, 0
      %v1089 = vsel %vm531, %v1034, 0
      %v1092 = vsel %vm531, %v1033, 0
      %v1095 = vsel %vm586, %v1039, 0
      %1097 = vmatprep.subr.bf16.mxu0 0
      %1098 = vmatpush1.bf16.msra.mxu0 0
      %1099 = vmatprep.subr.bf16.mxu0 0
      %1100 = vmatpush1.bf16.msra.mxu0 0
      %1101 = vmatprep.subr.bf16.mxu0 0
      %1102 = vmatpush1.bf16.msra.mxu0 0
      %1103 = vmatprep.subr.bf16.mxu0 0
      %1104 = vmatpush1.bf16.msra.mxu0 0
      %1105 = vmatprep.subr.bf16.mxu0 0
      %1106 = vmatpush1.bf16.msra.mxu0 0
      %1107 = vmatprep.subr.bf16.mxu0 0
      %1108 = vmatpush1.bf16.msra.mxu0 0
      %1109 = vmatprep.subr.bf16.mxu0 0
      %1110 = vmatpush1.bf16.msra.mxu0 0
      %1111 = vmatprep.subr.bf16.mxu0 0
      %1112 = vmatpush1.bf16.msra.mxu0 %v1095
      %1113 = vmatprep.subr.bf16.mxu0 0
      %1114 = vmatpush2.bf16.msra.mxu0 0
      %1115 = vmatprep.subr.bf16.mxu0 0
      %1116 = vmatpush2.bf16.msra.mxu0 0
      %1117 = vmatprep.subr.bf16.mxu0 0
      %1118 = vmatpush2.bf16.msra.mxu0 0
      %1119 = vmatprep.subr.bf16.mxu0 0
      %1120 = vmatpush2.bf16.msra.mxu0 0
      %1121 = vmatprep.subr.bf16.mxu0 0
      %1122 = vmatpush2.bf16.msra.mxu0 0
      %1123 = vmatprep.subr.bf16.mxu0 0
      %1124 = vmatpush2.bf16.msra.mxu0 0
      %1125 = vmatprep.subr.bf16.mxu0 0
      %1126 = vmatpush2.bf16.msra.mxu0 0
      %1127 = vmatprep.subr.bf16.mxu0 0
      %1128 = vmatpush2.bf16.msra.mxu0 0
      %1129 = vmatprep.mubr.bf16.mxu0 0
      %1130 = vmatmul.mubr.bf16.gmra.mxu0 %v1041
      %v1131 = vpop.f32.mrf.mxu0
      %v1132 = vadd.f32 0.0, %v1131
      %v1133 = vpop.f32.mrf.mxu0
      %v1134 = vpop.f32.mrf.mxu0
      %v1135 = vadd.f32 0.0, %v1134
      %v1136 = vpop.f32.mrf.mxu0
      %1137 = vmatprep.mubr.bf16.mxu0 0
      %1138 = vmatmul.mubr.bf16.gmra.mxu0 %v1044
      %v1139 = vpop.f32.mrf.mxu0
      %v1140 = vadd.f32 0.0, %v1139
      %v1141 = vpop.f32.mrf.mxu0
      %v1142 = vpop.f32.mrf.mxu0
      %v1143 = vadd.f32 0.0, %v1142
      %v1144 = vpop.f32.mrf.mxu0
      %1145 = vmatprep.mubr.bf16.mxu0 0
      %1146 = vmatmul.mubr.bf16.gmra.mxu0 %v1047
      %v1147 = vpop.f32.mrf.mxu0
      %v1148 = vadd.f32 0.0, %v1147
      %v1149 = vpop.f32.mrf.mxu0
      %v1150 = vpop.f32.mrf.mxu0
      %v1151 = vadd.f32 0.0, %v1150
      %v1152 = vpop.f32.mrf.mxu0
      %1153 = vmatprep.mubr.bf16.mxu0 0
      %1154 = vmatmul.mubr.bf16.gmra.mxu0 %v1050
      %v1155 = vpop.f32.mrf.mxu0
      %v1156 = vadd.f32 0.0, %v1155
      %v1157 = vpop.f32.mrf.mxu0
      %v1158 = vpop.f32.mrf.mxu0
      %v1159 = vadd.f32 0.0, %v1158
      %v1160 = vpop.f32.mrf.mxu0
      %1161 = vmatprep.mubr.bf16.mxu0 0
      %1162 = vmatmul.mubr.bf16.gmra.mxu0 %v1053
      %v1163 = vpop.f32.mrf.mxu0
      %v1164 = vadd.f32 0.0, %v1163
      %v1165 = vpop.f32.mrf.mxu0
      %v1166 = vpop.f32.mrf.mxu0
      %v1167 = vadd.f32 0.0, %v1166
      %v1168 = vpop.f32.mrf.mxu0
      %1169 = vmatprep.mubr.bf16.mxu0 0
      %1170 = vmatmul.mubr.bf16.gmra.mxu0 %v1056
      %v1171 = vpop.f32.mrf.mxu0
      %v1172 = vadd.f32 0.0, %v1171
      %v1173 = vpop.f32.mrf.mxu0
      %v1174 = vpop.f32.mrf.mxu0
      %v1175 = vadd.f32 0.0, %v1174
      %v1176 = vpop.f32.mrf.mxu0
      %1177 = vmatprep.mubr.bf16.mxu0 0
      %1178 = vmatmul.mubr.bf16.gmra.mxu0 %v1059
      %v1179 = vpop.f32.mrf.mxu0
      %v1180 = vadd.f32 0.0, %v1179
      %v1181 = vpop.f32.mrf.mxu0
      %v1182 = vpop.f32.mrf.mxu0
      %v1183 = vadd.f32 0.0, %v1182
      %v1184 = vpop.f32.mrf.mxu0
      %1185 = vmatprep.mubr.bf16.mxu0 0
      %1186 = vmatmul.mubr.bf16.gmra.mxu0 %v1062
      %v1187 = vpop.f32.mrf.mxu0
      %v1188 = vadd.f32 0.0, %v1187
      %v1189 = vpop.f32.mrf.mxu0
      %v1190 = vpop.f32.mrf.mxu0
      %v1191 = vadd.f32 0.0, %v1190
      %v1192 = vpop.f32.mrf.mxu0
      %1193 = vmatprep.mubr.bf16.mxu0 0
      %1194 = vmatmul.mubr.bf16.gmra.mxu0 %v1065
      %v1195 = vpop.f32.mrf.mxu0
      %v1196 = vadd.f32 0.0, %v1195
      %v1197 = vpop.f32.mrf.mxu0
      %v1198 = vpop.f32.mrf.mxu0
      %v1199 = vadd.f32 0.0, %v1198
      %v1200 = vpop.f32.mrf.mxu0
      %1201 = vmatprep.mubr.bf16.mxu0 0
      %1202 = vmatmul.mubr.bf16.gmra.mxu0 %v1068
      %v1203 = vpop.f32.mrf.mxu0
      %v1204 = vadd.f32 0.0, %v1203
      %v1205 = vpop.f32.mrf.mxu0
      %v1206 = vpop.f32.mrf.mxu0
      %v1207 = vadd.f32 0.0, %v1206
      %v1208 = vpop.f32.mrf.mxu0
      %1209 = vmatprep.mubr.bf16.mxu0 0
      %1210 = vmatmul.mubr.bf16.gmra.mxu0 %v1071
      %v1211 = vpop.f32.mrf.mxu0
      %v1212 = vadd.f32 0.0, %v1211
      %v1213 = vpop.f32.mrf.mxu0
      %v1214 = vpop.f32.mrf.mxu0
      %v1215 = vadd.f32 0.0, %v1214
      %v1216 = vpop.f32.mrf.mxu0
      %1217 = vmatprep.mubr.bf16.mxu0 0
      %1218 = vmatmul.mubr.bf16.gmra.mxu0 %v1074
      %v1219 = vpop.f32.mrf.mxu0
      %v1220 = vadd.f32 0.0, %v1219
      %v1221 = vpop.f32.mrf.mxu0
      %v1222 = vpop.f32.mrf.mxu0
      %v1223 = vadd.f32 0.0, %v1222
      %v1224 = vpop.f32.mrf.mxu0
      %1225 = vmatprep.mubr.bf16.mxu0 0
      %1226 = vmatmul.mubr.bf16.gmra.mxu0 %v1077
      %v1227 = vpop.f32.mrf.mxu0
      %v1228 = vadd.f32 0.0, %v1227
      %v1229 = vpop.f32.mrf.mxu0
      %v1230 = vpop.f32.mrf.mxu0
      %v1231 = vadd.f32 0.0, %v1230
      %v1232 = vpop.f32.mrf.mxu0
      %1233 = vmatprep.mubr.bf16.mxu0 0
      %1234 = vmatmul.mubr.bf16.gmra.mxu0 %v1080
      %v1235 = vpop.f32.mrf.mxu0
      %v1236 = vadd.f32 0.0, %v1235
      %v1237 = vpop.f32.mrf.mxu0
      %v1238 = vpop.f32.mrf.mxu0
      %v1239 = vadd.f32 0.0, %v1238
      %v1240 = vpop.f32.mrf.mxu0
      %1241 = vmatprep.mubr.bf16.mxu0 0
      %1242 = vmatmul.mubr.bf16.gmra.mxu0 %v1083
      %v1243 = vpop.f32.mrf.mxu0
      %v1244 = vadd.f32 0.0, %v1243
      %v1245 = vpop.f32.mrf.mxu0
      %v1246 = vpop.f32.mrf.mxu0
      %v1247 = vadd.f32 0.0, %v1246
      %v1248 = vpop.f32.mrf.mxu0
      %1249 = vmatprep.mubr.bf16.mxu0 0
      %1250 = vmatmul.mubr.bf16.gmra.mxu0 %v1086
      %v1251 = vpop.f32.mrf.mxu0
      %v1252 = vadd.f32 0.0, %v1251
      %v1253 = vpop.f32.mrf.mxu0
      %v1254 = vpop.f32.mrf.mxu0
      %v1255 = vadd.f32 0.0, %v1254
      %v1256 = vpop.f32.mrf.mxu0
      %1257 = vmatprep.mubr.bf16.mxu0 0
      %1258 = vmatmul.mubr.bf16.gmra.mxu0 %v1089
      %v1259 = vpop.f32.mrf.mxu0
      %v1260 = vadd.f32 0.0, %v1259
      %v1261 = vpop.f32.mrf.mxu0
      %v1262 = vpop.f32.mrf.mxu0
      %v1263 = vadd.f32 0.0, %v1262
      %v1264 = vpop.f32.mrf.mxu0
      %1265 = vmatprep.mubr.bf16.mxu0 0
      %1266 = vmatmul.mubr.bf16.gmra.mxu0 %v1092
      %v1267 = vpop.f32.mrf.mxu0
      %v1268 = vadd.f32 0.0, %v1267
      %v1269 = vpop.f32.mrf.mxu0
      %v1270 = vpop.f32.mrf.mxu0
      %v1271 = vadd.f32 0.0, %v1270
      %v1272 = vpop.f32.mrf.mxu0
      %1273 = vdwg.mxu0
      %v1274 = vadd.f32 %v850, %v1132
      %v1275 = vadd.f32 %v853, %v1135
      %v1276 = vadd.f32 %v858, %v1140
      %v1277 = vadd.f32 %v861, %v1143
      %v1278 = vadd.f32 %v866, %v1148
      %v1279 = vadd.f32 %v869, %v1151
      %v1280 = vadd.f32 %v874, %v1156
      %v1281 = vadd.f32 %v877, %v1159
      %v1282 = vadd.f32 %v882, %v1164
      %v1283 = vadd.f32 %v885, %v1167
      %v1284 = vadd.f32 %v890, %v1172
      %v1285 = vadd.f32 %v893, %v1175
      %v1286 = vadd.f32 %v898, %v1180
      %v1287 = vadd.f32 %v901, %v1183
      %v1288 = vadd.f32 %v906, %v1188
      %v1289 = vadd.f32 %v909, %v1191
      %v1290 = vadd.f32 %v914, %v1196
      %v1291 = vadd.f32 %v917, %v1199
      %v1292 = vadd.f32 %v922, %v1204
      %v1293 = vadd.f32 %v925, %v1207
      %v1294 = vadd.f32 %v930, %v1212
      %v1295 = vadd.f32 %v933, %v1215
      %v1296 = vadd.f32 %v938, %v1220
      %v1297 = vadd.f32 %v941, %v1223
      %v1298 = vadd.f32 %v946, %v1228
      %v1299 = vadd.f32 %v949, %v1231
      %v1300 = vadd.f32 %v954, %v1236
      %v1301 = vadd.f32 %v957, %v1239
      %v1302 = vadd.f32 %v962, %v1244
      %v1303 = vadd.f32 %v965, %v1247
      %v1304 = vadd.f32 %v970, %v1252
      %v1305 = vadd.f32 %v973, %v1255
      %v1306 = vadd.f32 %v978, %v1260
      %v1307 = vadd.f32 %v981, %v1263
      %v1308 = vadd.f32 %v986, %v1268
      %v1309 = vadd.f32 %v989, %v1271
      %v1310 = vld [vmem:[%s2] sm:$0xff]
      %v1311 = vld [vmem:[%s2 + $0x8] sm:$0xff]
      %v1312 = vld [vmem:[%s2 + $0x10] sm:$0xff]
      %v1313 = vld [vmem:[%s2 + $0x18] sm:$0xff]
      %v1314 = vld [vmem:[%s2 + $0x20] sm:$0xff]
      %v1315 = vld [vmem:[%s2 + $0x28] sm:$0xff]
      %v1316 = vld [vmem:[%s2 + $0x30] sm:$0xff]
      %v1317 = vld [vmem:[%s2 + $0x38] sm:$0xff]
      %v1318 = vld [vmem:[%s2 + $0x40] sm:$0xff]
      %v1319 = vld [vmem:[%s2 + $0x48] sm:$0xff]
      %v1320 = vld [vmem:[%s2 + $0x50] sm:$0xff]
      %v1321 = vld [vmem:[%s2 + $0x58] sm:$0xff]
      %v1322 = vld [vmem:[%s2 + $0x60] sm:$0xff]
      %v1323 = vld [vmem:[%s2 + $0x68] sm:$0xff]
      %v1324 = vld [vmem:[%s2 + $0x70] sm:$0xff]
      %v1325 = vld [vmem:[%s2 + $0x78] sm:$0xff]
      %v1326 = vld [vmem:[%s2 + $0x80] sm:$0xff]
      %v1327 = vld [vmem:[%s2 + $0x88] sm:$0xff]
      %v1328 = vld [vmem:[%s2 + $0x90] sm:$0xff]
      %v1329 = vld [vmem:[%s2 + $0x98] sm:$0xff]
      %v1330 = vld [vmem:[%s2 + $0xa0] sm:$0xff]
      %v1331 = vld [vmem:[%s2 + $0xa8] sm:$0xff]
      %v1332 = vld [vmem:[%s2 + $0xb0] sm:$0xff]
      %v1333 = vld [vmem:[%s2 + $0xb8] sm:$0xff]
      %v1334 = vld [vmem:[%s2 + $0xc0] sm:$0xff]
      %v1335 = vld [vmem:[%s2 + $0xc8] sm:$0xff]
      %v1336 = vld [vmem:[%s2 + $0xd0] sm:$0xff]
      %v1337 = vld [vmem:[%s2 + $0xd8] sm:$0xff]
      %v1338 = vld [vmem:[%s2 + $0xe0] sm:$0xff]
      %v1339 = vld [vmem:[%s2 + $0xe8] sm:$0xff]
      %v1340 = vld [vmem:[%s2 + $0xf0] sm:$0xff]
      %v1341 = vld [vmem:[%s2 + $0xf8] sm:$0xff]
      %v1342 = vld [vmem:[%s2 + $0x100] sm:$0xff]
      %v1343 = vld [vmem:[%s2 + $0x108] sm:$0xff]
      %v1344 = vld [vmem:[%s2 + $0x110] sm:$0xff]
      %v1345 = vld [vmem:[%s2 + $0x118] sm:$0x3f]
      %1347 = vset.pattern.permute.xlu0 0
      %1348 = vperm.xlu0 %1347, %v1310
      %v1349 = vpop.permute.xlu0 %1348
      %1352 = vset.pattern.permute.xlu0 0
      %1353 = vperm.xlu0 %1352, %v1311
      %v1354 = vpop.permute.xlu0 %1353
      %1357 = vset.pattern.permute.xlu0 0
      %1358 = vperm.xlu0 %1357, %v1312
      %v1359 = vpop.permute.xlu0 %1358
      %1362 = vset.pattern.permute.xlu0 0
      %1363 = vperm.xlu0 %1362, %v1313
      %v1364 = vpop.permute.xlu0 %1363
      %1367 = vset.pattern.permute.xlu0 0
      %1368 = vperm.xlu0 %1367, %v1314
      %v1369 = vpop.permute.xlu0 %1368
      %1372 = vset.pattern.permute.xlu0 0
      %1373 = vperm.xlu0 %1372, %v1315
      %v1374 = vpop.permute.xlu0 %1373
      %1377 = vset.pattern.permute.xlu0 0
      %1378 = vperm.xlu0 %1377, %v1316
      %v1379 = vpop.permute.xlu0 %1378
      %1382 = vset.pattern.permute.xlu0 0
      %1383 = vperm.xlu0 %1382, %v1317
      %v1384 = vpop.permute.xlu0 %1383
      %1387 = vset.pattern.permute.xlu0 0
      %1388 = vperm.xlu0 %1387, %v1318
      %v1389 = vpop.permute.xlu0 %1388
      %1392 = vset.pattern.permute.xlu0 0
      %1393 = vperm.xlu0 %1392, %v1319
      %v1394 = vpop.permute.xlu0 %1393
      %1397 = vset.pattern.permute.xlu0 0
      %1398 = vperm.xlu0 %1397, %v1320
      %v1399 = vpop.permute.xlu0 %1398
      %1402 = vset.pattern.permute.xlu0 0
      %1403 = vperm.xlu0 %1402, %v1321
      %v1404 = vpop.permute.xlu0 %1403
      %1407 = vset.pattern.permute.xlu0 0
      %1408 = vperm.xlu0 %1407, %v1322
      %v1409 = vpop.permute.xlu0 %1408
      %1412 = vset.pattern.permute.xlu0 0
      %1413 = vperm.xlu0 %1412, %v1323
      %v1414 = vpop.permute.xlu0 %1413
      %1417 = vset.pattern.permute.xlu0 0
      %1418 = vperm.xlu0 %1417, %v1324
      %v1419 = vpop.permute.xlu0 %1418
      %1422 = vset.pattern.permute.xlu0 0
      %1423 = vperm.xlu0 %1422, %v1325
      %v1424 = vpop.permute.xlu0 %1423
      %1427 = vset.pattern.permute.xlu0 0
      %1428 = vperm.xlu0 %1427, %v1326
      %v1429 = vpop.permute.xlu0 %1428
      %1432 = vset.pattern.permute.xlu0 0
      %1433 = vperm.xlu0 %1432, %v1327
      %v1434 = vpop.permute.xlu0 %1433
      %1437 = vset.pattern.permute.xlu0 0
      %1438 = vperm.xlu0 %1437, %v1328
      %v1439 = vpop.permute.xlu0 %1438
      %1442 = vset.pattern.permute.xlu0 0
      %1443 = vperm.xlu0 %1442, %v1329
      %v1444 = vpop.permute.xlu0 %1443
      %1447 = vset.pattern.permute.xlu0 0
      %1448 = vperm.xlu0 %1447, %v1330
      %v1449 = vpop.permute.xlu0 %1448
      %1452 = vset.pattern.permute.xlu0 0
      %1453 = vperm.xlu0 %1452, %v1331
      %v1454 = vpop.permute.xlu0 %1453
      %1457 = vset.pattern.permute.xlu0 0
      %1458 = vperm.xlu0 %1457, %v1332
      %v1459 = vpop.permute.xlu0 %1458
      %1462 = vset.pattern.permute.xlu0 0
      %1463 = vperm.xlu0 %1462, %v1333
      %v1464 = vpop.permute.xlu0 %1463
      %1467 = vset.pattern.permute.xlu0 0
      %1468 = vperm.xlu0 %1467, %v1334
      %v1469 = vpop.permute.xlu0 %1468
      %1472 = vset.pattern.permute.xlu0 0
      %1473 = vperm.xlu0 %1472, %v1335
      %v1474 = vpop.permute.xlu0 %1473
      %1477 = vset.pattern.permute.xlu0 0
      %1478 = vperm.xlu0 %1477, %v1336
      %v1479 = vpop.permute.xlu0 %1478
      %1482 = vset.pattern.permute.xlu0 0
      %1483 = vperm.xlu0 %1482, %v1337
      %v1484 = vpop.permute.xlu0 %1483
      %1487 = vset.pattern.permute.xlu0 0
      %1488 = vperm.xlu0 %1487, %v1338
      %v1489 = vpop.permute.xlu0 %1488
      %1492 = vset.pattern.permute.xlu0 0
      %1493 = vperm.xlu0 %1492, %v1339
      %v1494 = vpop.permute.xlu0 %1493
      %1497 = vset.pattern.permute.xlu0 0
      %1498 = vperm.xlu0 %1497, %v1340
      %v1499 = vpop.permute.xlu0 %1498
      %1502 = vset.pattern.permute.xlu0 0
      %1503 = vperm.xlu0 %1502, %v1341
      %v1504 = vpop.permute.xlu0 %1503
      %1507 = vset.pattern.permute.xlu0 0
      %1508 = vperm.xlu0 %1507, %v1342
      %v1509 = vpop.permute.xlu0 %1508
      %1512 = vset.pattern.permute.xlu0 0
      %1513 = vperm.xlu0 %1512, %v1343
      %v1514 = vpop.permute.xlu0 %1513
      %1517 = vset.pattern.permute.xlu0 0
      %1518 = vperm.xlu0 %1517, %v1344
      %v1519 = vpop.permute.xlu0 %1518
      %1522 = vset.pattern.permute.xlu0 0
      %1523 = vperm.xlu0 %1522, %v1345
      %v1524 = vpop.permute.xlu0 %1523
      %v1526 = vmul.f32 %v1274, %v1349
      %v1527 = vmul.f32 %v1275, %v1354
      %v1528 = vmul.f32 %v1276, %v1359
      %v1529 = vmul.f32 %v1277, %v1364
      %v1530 = vmul.f32 %v1278, %v1369
      %v1531 = vmul.f32 %v1279, %v1374
      %v1532 = vmul.f32 %v1280, %v1379
      %v1533 = vmul.f32 %v1281, %v1384
      %v1534 = vmul.f32 %v1282, %v1389
      %v1535 = vmul.f32 %v1283, %v1394
      %v1536 = vmul.f32 %v1284, %v1399
      %v1537 = vmul.f32 %v1285, %v1404
      %v1538 = vmul.f32 %v1286, %v1409
      %v1539 = vmul.f32 %v1287, %v1414
      %v1540 = vmul.f32 %v1288, %v1419
      %v1541 = vmul.f32 %v1289, %v1424
      %v1542 = vmul.f32 %v1290, %v1429
      %v1543 = vmul.f32 %v1291, %v1434
      %v1544 = vmul.f32 %v1292, %v1439
      %v1545 = vmul.f32 %v1293, %v1444
      %v1546 = vmul.f32 %v1294, %v1449
      %v1547 = vmul.f32 %v1295, %v1454
      %v1548 = vmul.f32 %v1296, %v1459
      %v1549 = vmul.f32 %v1297, %v1464
      %v1550 = vmul.f32 %v1298, %v1469
      %v1551 = vmul.f32 %v1299, %v1474
      %v1552 = vmul.f32 %v1300, %v1479
      %v1553 = vmul.f32 %v1301, %v1484
      %v1554 = vmul.f32 %v1302, %v1489
      %v1555 = vmul.f32 %v1303, %v1494
      %v1556 = vmul.f32 %v1304, %v1499
      %v1557 = vmul.f32 %v1305, %v1504
      %v1558 = vmul.f32 %v1306, %v1509
      %v1559 = vmul.f32 %v1307, %v1514
      %v1560 = vmul.f32 %v1308, %v1519
      %v1561 = vmul.f32 %v1309, %v1524
      %vm1562 = vcmask 64512
      %v1563 = vsel %vm1562, %v1526, 0.0
      %v1564 = vsel %vm1562, %v1527, 0.0
      %v1565 = vadd.f32 %v1563, %v1564
      %v1566 = vsel %vm1562, %v1528, 0.0
      %v1567 = vadd.f32 %v1565, %v1566
      %v1568 = vsel %vm1562, %v1529, 0.0
      %v1569 = vadd.f32 %v1567, %v1568
      %v1570 = vsel %vm1562, %v1530, 0.0
      %v1571 = vadd.f32 %v1569, %v1570
      %v1572 = vsel %vm1562, %v1531, 0.0
      %v1573 = vadd.f32 %v1571, %v1572
      %v1574 = vsel %vm1562, %v1532, 0.0
      %v1575 = vadd.f32 %v1573, %v1574
      %v1576 = vsel %vm1562, %v1533, 0.0
      %v1577 = vadd.f32 %v1575, %v1576
      %v1578 = vsel %vm1562, %v1534, 0.0
      %v1579 = vadd.f32 %v1577, %v1578
      %v1580 = vsel %vm1562, %v1535, 0.0
      %v1581 = vadd.f32 %v1579, %v1580
      %v1582 = vsel %vm1562, %v1536, 0.0
      %v1583 = vadd.f32 %v1581, %v1582
      %v1584 = vsel %vm1562, %v1537, 0.0
      %v1585 = vadd.f32 %v1583, %v1584
      %v1586 = vsel %vm1562, %v1538, 0.0
      %v1587 = vadd.f32 %v1585, %v1586
      %v1588 = vsel %vm1562, %v1539, 0.0
      %v1589 = vadd.f32 %v1587, %v1588
      %v1590 = vsel %vm1562, %v1540, 0.0
      %v1591 = vadd.f32 %v1589, %v1590
      %v1592 = vsel %vm1562, %v1541, 0.0
      %v1593 = vadd.f32 %v1591, %v1592
      %v1594 = vsel %vm1562, %v1542, 0.0
      %v1595 = vadd.f32 %v1593, %v1594
      %v1596 = vsel %vm1562, %v1543, 0.0
      %v1597 = vadd.f32 %v1595, %v1596
      %v1598 = vsel %vm1562, %v1544, 0.0
      %v1599 = vadd.f32 %v1597, %v1598
      %v1600 = vsel %vm1562, %v1545, 0.0
      %v1601 = vadd.f32 %v1599, %v1600
      %v1602 = vsel %vm1562, %v1546, 0.0
      %v1603 = vadd.f32 %v1601, %v1602
      %v1604 = vsel %vm1562, %v1547, 0.0
      %v1605 = vadd.f32 %v1603, %v1604
      %v1606 = vsel %vm1562, %v1548, 0.0
      %v1607 = vadd.f32 %v1605, %v1606
      %v1608 = vsel %vm1562, %v1549, 0.0
      %v1609 = vadd.f32 %v1607, %v1608
      %v1610 = vsel %vm1562, %v1550, 0.0
      %v1611 = vadd.f32 %v1609, %v1610
      %v1612 = vsel %vm1562, %v1551, 0.0
      %v1613 = vadd.f32 %v1611, %v1612
      %v1614 = vsel %vm1562, %v1552, 0.0
      %v1615 = vadd.f32 %v1613, %v1614
      %v1616 = vsel %vm1562, %v1553, 0.0
      %v1617 = vadd.f32 %v1615, %v1616
      %v1618 = vsel %vm1562, %v1554, 0.0
      %v1619 = vadd.f32 %v1617, %v1618
      %v1620 = vsel %vm1562, %v1555, 0.0
      %v1621 = vadd.f32 %v1619, %v1620
      %v1622 = vsel %vm1562, %v1556, 0.0
      %v1623 = vadd.f32 %v1621, %v1622
      %v1624 = vsel %vm1562, %v1557, 0.0
      %v1625 = vadd.f32 %v1623, %v1624
      %v1626 = vsel %vm1562, %v1558, 0.0
      %v1627 = vadd.f32 %v1625, %v1626
      %v1628 = vsel %vm1562, %v1559, 0.0
      %v1629 = vadd.f32 %v1627, %v1628
      %v1630 = vsel %vm1562, %v1560, 0.0
      %v1631 = vadd.f32 %v1629, %v1630
      %vm1632 = vcmask 62464
      %v1633 = vsel %vm1632, %v1561, 0.0
      %v1634 = vadd.f32 %v1631, %v1633
      %v1635 = vrot.slane %v1634, 4
      %v1636 = vadd.f32 %v1634, %v1635
      %v1637 = vrot.slane %v1636, 2
      %v1638 = vadd.f32 %v1636, %v1637
      %v1639 = vrot.slane %v1638, 1
      %v1640 = vadd.f32 %v1638, %v1639
      %1641 = vst.msk [vmem:[%s244] sm:$0xff] %vm1562, %v1640
      %v1642 = vmul.f32 %v1526, %v1274
      %v1643 = vmul.f32 %v1527, %v1275
      %v1644 = vmul.f32 %v1528, %v1276
      %v1645 = vmul.f32 %v1529, %v1277
      %v1646 = vmul.f32 %v1530, %v1278
      %v1647 = vmul.f32 %v1531, %v1279
      %v1648 = vmul.f32 %v1532, %v1280
      %v1649 = vmul.f32 %v1533, %v1281
      %v1650 = vmul.f32 %v1534, %v1282
      %v1651 = vmul.f32 %v1535, %v1283
      %v1652 = vmul.f32 %v1536, %v1284
      %v1653 = vmul.f32 %v1537, %v1285
      %v1654 = vmul.f32 %v1538, %v1286
      %v1655 = vmul.f32 %v1539, %v1287
      %v1656 = vmul.f32 %v1540, %v1288
      %v1657 = vmul.f32 %v1541, %v1289
      %v1658 = vmul.f32 %v1542, %v1290
      %v1659 = vmul.f32 %v1543, %v1291
      %v1660 = vmul.f32 %v1544, %v1292
      %v1661 = vmul.f32 %v1545, %v1293
      %v1662 = vmul.f32 %v1546, %v1294
      %v1663 = vmul.f32 %v1547, %v1295
      %v1664 = vmul.f32 %v1548, %v1296
      %v1665 = vmul.f32 %v1549, %v1297
      %v1666 = vmul.f32 %v1550, %v1298
      %v1667 = vmul.f32 %v1551, %v1299
      %v1668 = vmul.f32 %v1552, %v1300
      %v1669 = vmul.f32 %v1553, %v1301
      %v1670 = vmul.f32 %v1554, %v1302
      %v1671 = vmul.f32 %v1555, %v1303
      %v1672 = vmul.f32 %v1556, %v1304
      %v1673 = vmul.f32 %v1557, %v1305
      %v1674 = vmul.f32 %v1558, %v1306
      %v1675 = vmul.f32 %v1559, %v1307
      %v1676 = vmul.f32 %v1560, %v1308
      %v1677 = vmul.f32 %v1561, %v1309
      %v1678 = vsel %vm1562, %v1642, 0.0
      %v1679 = vsel %vm1562, %v1643, 0.0
      %v1680 = vadd.f32 %v1678, %v1679
      %v1681 = vsel %vm1562, %v1644, 0.0
      %v1682 = vadd.f32 %v1680, %v1681
      %v1683 = vsel %vm1562, %v1645, 0.0
      %v1684 = vadd.f32 %v1682, %v1683
      %v1685 = vsel %vm1562, %v1646, 0.0
      %v1686 = vadd.f32 %v1684, %v1685
      %v1687 = vsel %vm1562, %v1647, 0.0
      %v1688 = vadd.f32 %v1686, %v1687
      %v1689 = vsel %vm1562, %v1648, 0.0
      %v1690 = vadd.f32 %v1688, %v1689
      %v1691 = vsel %vm1562, %v1649, 0.0
      %v1692 = vadd.f32 %v1690, %v1691
      %v1693 = vsel %vm1562, %v1650, 0.0
      %v1694 = vadd.f32 %v1692, %v1693
      %v1695 = vsel %vm1562, %v1651, 0.0
      %v1696 = vadd.f32 %v1694, %v1695
      %v1697 = vsel %vm1562, %v1652, 0.0
      %v1698 = vadd.f32 %v1696, %v1697
      %v1699 = vsel %vm1562, %v1653, 0.0
      %v1700 = vadd.f32 %v1698, %v1699
      %v1701 = vsel %vm1562, %v1654, 0.0
      %v1702 = vadd.f32 %v1700, %v1701
      %v1703 = vsel %vm1562, %v1655, 0.0
      %v1704 = vadd.f32 %v1702, %v1703
      %v1705 = vsel %vm1562, %v1656, 0.0
      %v1706 = vadd.f32 %v1704, %v1705
      %v1707 = vsel %vm1562, %v1657, 0.0
      %v1708 = vadd.f32 %v1706, %v1707
      %v1709 = vsel %vm1562, %v1658, 0.0
      %v1710 = vadd.f32 %v1708, %v1709
      %v1711 = vsel %vm1562, %v1659, 0.0
      %v1712 = vadd.f32 %v1710, %v1711
      %v1713 = vsel %vm1562, %v1660, 0.0
      %v1714 = vadd.f32 %v1712, %v1713
      %v1715 = vsel %vm1562, %v1661, 0.0
      %v1716 = vadd.f32 %v1714, %v1715
      %v1717 = vsel %vm1562, %v1662, 0.0
      %v1718 = vadd.f32 %v1716, %v1717
      %v1719 = vsel %vm1562, %v1663, 0.0
      %v1720 = vadd.f32 %v1718, %v1719
      %v1721 = vsel %vm1562, %v1664, 0.0
      %v1722 = vadd.f32 %v1720, %v1721
      %v1723 = vsel %vm1562, %v1665, 0.0
      %v1724 = vadd.f32 %v1722, %v1723
      %v1725 = vsel %vm1562, %v1666, 0.0
      %v1726 = vadd.f32 %v1724, %v1725
      %v1727 = vsel %vm1562, %v1667, 0.0
      %v1728 = vadd.f32 %v1726, %v1727
      %v1729 = vsel %vm1562, %v1668, 0.0
      %v1730 = vadd.f32 %v1728, %v1729
      %v1731 = vsel %vm1562, %v1669, 0.0
      %v1732 = vadd.f32 %v1730, %v1731
      %v1733 = vsel %vm1562, %v1670, 0.0
      %v1734 = vadd.f32 %v1732, %v1733
      %v1735 = vsel %vm1562, %v1671, 0.0
      %v1736 = vadd.f32 %v1734, %v1735
      %v1737 = vsel %vm1562, %v1672, 0.0
      %v1738 = vadd.f32 %v1736, %v1737
      %v1739 = vsel %vm1562, %v1673, 0.0
      %v1740 = vadd.f32 %v1738, %v1739
      %v1741 = vsel %vm1562, %v1674, 0.0
      %v1742 = vadd.f32 %v1740, %v1741
      %v1743 = vsel %vm1562, %v1675, 0.0
      %v1744 = vadd.f32 %v1742, %v1743
      %v1745 = vsel %vm1562, %v1676, 0.0
      %v1746 = vadd.f32 %v1744, %v1745
      %v1747 = vsel %vm1632, %v1677, 0.0
      %v1748 = vadd.f32 %v1746, %v1747
      %v1749 = vrot.slane %v1748, 4
      %v1750 = vadd.f32 %v1748, %v1749
      %v1751 = vrot.slane %v1750, 2
      %v1752 = vadd.f32 %v1750, %v1751
      %v1753 = vrot.slane %v1752, 1
      %v1754 = vadd.f32 %v1752, %v1753
      %1755 = vst.msk [vmem:[%s248] sm:$0xff] %vm1562, %v1754
      %v1756 = vpack.c.bf16 %v1275, %v1274
      %v1757 = vpack.c.bf16 %v1277, %v1276
      %v1758 = vpack.c.bf16 %v1279, %v1278
      %v1759 = vpack.c.bf16 %v1281, %v1280
      %v1760 = vpack.c.bf16 %v1283, %v1282
      %v1761 = vpack.c.bf16 %v1285, %v1284
      %v1762 = vpack.c.bf16 %v1287, %v1286
      %v1763 = vpack.c.bf16 %v1289, %v1288
      %v1764 = vpack.c.bf16 %v1291, %v1290
      %v1765 = vpack.c.bf16 %v1293, %v1292
      %v1766 = vpack.c.bf16 %v1295, %v1294
      %v1767 = vpack.c.bf16 %v1297, %v1296
      %v1768 = vpack.c.bf16 %v1299, %v1298
      %v1769 = vpack.c.bf16 %v1301, %v1300
      %v1770 = vpack.c.bf16 %v1303, %v1302
      %v1771 = vpack.c.bf16 %v1305, %v1304
      %v1772 = vpack.c.bf16 %v1307, %v1306
      %v1773 = vpack.c.bf16 %v1309, %v1308
      %v1792 = vunpack.c.l.b16 %v1756
      %v1793 = vunpack.c.h.b16 %v1756
      %v1794 = vunpack.c.l.b16 %v1757
      %v1795 = vunpack.c.h.b16 %v1757
      %v1796 = vunpack.c.l.b16 %v1758
      %v1797 = vunpack.c.h.b16 %v1758
      %v1798 = vunpack.c.l.b16 %v1759
      %v1799 = vunpack.c.h.b16 %v1759
      %v1800 = vunpack.c.l.b16 %v1760
      %v1801 = vunpack.c.h.b16 %v1760
      %v1802 = vunpack.c.l.b16 %v1761
      %v1803 = vunpack.c.h.b16 %v1761
      %v1804 = vunpack.c.l.b16 %v1762
      %v1805 = vunpack.c.h.b16 %v1762
      %v1806 = vunpack.c.l.b16 %v1763
      %v1807 = vunpack.c.h.b16 %v1763
      %v1808 = vunpack.c.l.b16 %v1764
      %v1809 = vunpack.c.h.b16 %v1764
      %v1810 = vunpack.c.l.b16 %v1765
      %v1811 = vunpack.c.h.b16 %v1765
      %v1812 = vunpack.c.l.b16 %v1766
      %v1813 = vunpack.c.h.b16 %v1766
      %v1814 = vunpack.c.l.b16 %v1767
      %v1815 = vunpack.c.h.b16 %v1767
      %v1816 = vunpack.c.l.b16 %v1768
      %v1817 = vunpack.c.h.b16 %v1768
      %v1818 = vunpack.c.l.b16 %v1769
      %v1819 = vunpack.c.h.b16 %v1769
      %v1820 = vunpack.c.l.b16 %v1770
      %v1821 = vunpack.c.h.b16 %v1770
      %v1822 = vunpack.c.l.b16 %v1771
      %v1823 = vunpack.c.h.b16 %v1771
      %v1824 = vunpack.c.l.b16 %v1772
      %v1825 = vunpack.c.h.b16 %v1772
      %v1826 = vunpack.c.l.b16 %v1773
      %v1827 = vunpack.c.h.b16 %v1773
      %v1828 = vpack.c.b16 %v1792, %v1792
      %v1829 = vpack.c.b16 %v1793, %v1793
      %v1830 = vpack.c.b16 %v1794, %v1794
      %v1831 = vpack.c.b16 %v1795, %v1795
      %v1832 = vpack.c.b16 %v1796, %v1796
      %v1833 = vpack.c.b16 %v1797, %v1797
      %v1834 = vpack.c.b16 %v1798, %v1798
      %v1835 = vpack.c.b16 %v1799, %v1799
      %v1836 = vpack.c.b16 %v1800, %v1800
      %v1837 = vpack.c.b16 %v1801, %v1801
      %v1838 = vpack.c.b16 %v1802, %v1802
      %v1839 = vpack.c.b16 %v1803, %v1803
      %v1840 = vpack.c.b16 %v1804, %v1804
      %v1841 = vpack.c.b16 %v1805, %v1805
      %v1842 = vpack.c.b16 %v1806, %v1806
      %v1843 = vpack.c.b16 %v1807, %v1807
      %v1844 = vpack.c.b16 %v1808, %v1808
      %v1845 = vpack.c.b16 %v1809, %v1809
      %v1846 = vpack.c.b16 %v1810, %v1810
      %v1847 = vpack.c.b16 %v1811, %v1811
      %v1848 = vpack.c.b16 %v1812, %v1812
      %v1849 = vpack.c.b16 %v1813, %v1813
      %v1850 = vpack.c.b16 %v1814, %v1814
      %v1851 = vpack.c.b16 %v1815, %v1815
      %v1852 = vpack.c.b16 %v1816, %v1816
      %v1853 = vpack.c.b16 %v1817, %v1817
      %v1854 = vpack.c.b16 %v1818, %v1818
      %v1855 = vpack.c.b16 %v1819, %v1819
      %v1856 = vpack.c.b16 %v1820, %v1820
      %v1857 = vpack.c.b16 %v1821, %v1821
      %v1858 = vpack.c.b16 %v1822, %v1822
      %v1859 = vpack.c.b16 %v1823, %v1823
      %v1860 = vpack.c.b16 %v1824, %v1824
      %v1861 = vpack.c.b16 %v1825, %v1825
      %v1862 = vpack.c.b16 %v1826, %v1826
      %v1863 = vpack.c.b16 %v1827, %v1827
      %vm1900 = vcmask 60416
      %1901 = vst.msk [vmem:[%s239] sm:$0xf] %vm1900, %v1828
      %1902 = vst.msk [vmem:[%s239 + $0x4] sm:$0xf] %vm1900, %v1829
      %1903 = vst.msk [vmem:[%s239 + $0x8] sm:$0xf] %vm1900, %v1830
      %1904 = vst.msk [vmem:[%s239 + $0xc] sm:$0xf] %vm1900, %v1831
      %1905 = vst.msk [vmem:[%s239 + $0x10] sm:$0xf] %vm1900, %v1832
      %1906 = vst.msk [vmem:[%s239 + $0x14] sm:$0xf] %vm1900, %v1833
      %1907 = vst.msk [vmem:[%s239 + $0x18] sm:$0xf] %vm1900, %v1834
      %1908 = vst.msk [vmem:[%s239 + $0x1c] sm:$0xf] %vm1900, %v1835
      %1909 = vst.msk [vmem:[%s239 + $0x20] sm:$0xf] %vm1900, %v1836
      %1910 = vst.msk [vmem:[%s239 + $0x24] sm:$0xf] %vm1900, %v1837
      %1911 = vst.msk [vmem:[%s239 + $0x28] sm:$0xf] %vm1900, %v1838
      %1912 = vst.msk [vmem:[%s239 + $0x2c] sm:$0xf] %vm1900, %v1839
      %1913 = vst.msk [vmem:[%s239 + $0x30] sm:$0xf] %vm1900, %v1840
      %1914 = vst.msk [vmem:[%s239 + $0x34] sm:$0xf] %vm1900, %v1841
      %1915 = vst.msk [vmem:[%s239 + $0x38] sm:$0xf] %vm1900, %v1842
      %1916 = vst.msk [vmem:[%s239 + $0x3c] sm:$0xf] %vm1900, %v1843
      %1917 = vst.msk [vmem:[%s239 + $0x40] sm:$0xf] %vm1900, %v1844
      %1918 = vst.msk [vmem:[%s239 + $0x44] sm:$0xf] %vm1900, %v1845
      %1919 = vst.msk [vmem:[%s239 + $0x48] sm:$0xf] %vm1900, %v1846
      %1920 = vst.msk [vmem:[%s239 + $0x4c] sm:$0xf] %vm1900, %v1847
      %1921 = vst.msk [vmem:[%s239 + $0x50] sm:$0xf] %vm1900, %v1848
      %1922 = vst.msk [vmem:[%s239 + $0x54] sm:$0xf] %vm1900, %v1849
      %1923 = vst.msk [vmem:[%s239 + $0x58] sm:$0xf] %vm1900, %v1850
      %1924 = vst.msk [vmem:[%s239 + $0x5c] sm:$0xf] %vm1900, %v1851
      %1925 = vst.msk [vmem:[%s239 + $0x60] sm:$0xf] %vm1900, %v1852
      %1926 = vst.msk [vmem:[%s239 + $0x64] sm:$0xf] %vm1900, %v1853
      %1927 = vst.msk [vmem:[%s239 + $0x68] sm:$0xf] %vm1900, %v1854
      %1928 = vst.msk [vmem:[%s239 + $0x6c] sm:$0xf] %vm1900, %v1855
      %1929 = vst.msk [vmem:[%s239 + $0x70] sm:$0xf] %vm1900, %v1856
      %1930 = vst.msk [vmem:[%s239 + $0x74] sm:$0xf] %vm1900, %v1857
      %1931 = vst.msk [vmem:[%s239 + $0x78] sm:$0xf] %vm1900, %v1858
      %1932 = vst.msk [vmem:[%s239 + $0x7c] sm:$0xf] %vm1900, %v1859
      %1933 = vst.msk [vmem:[%s239 + $0x80] sm:$0xf] %vm1900, %v1860
      %1934 = vst.msk [vmem:[%s239 + $0x84] sm:$0xf] %vm1900, %v1861
      %1935 = vst.msk [vmem:[%s239 + $0x88] sm:$0xf] %vm1900, %v1862
      %vm1936 = vcmask 59392
      %1937 = vst.msk [vmem:[%s239 + $0x8c] sm:$0x7] %vm1936, %v1863
      %vm1938 = vcmask 60419
      %1939 = vst.msk [vmem:[%s239 + $0x8c] sm:$0x8] %vm1938, 0
      %s1940 = smul.u32 36, %s17
      %p1941 = scmp.lt.s32.totalorder %s1940, 71
      %s1942 = scalar_select %p1941, %s1940, 71
      %s1943 = smul.addr %s1942, 4
      %s1944 = scalar_lea.vmem %s3, %s1943
      %p1945 = scmp.lt.s32.totalorder %s17, 1
      %s1946 = scalar_select %p1945, %s17, 1
      %s1947 = smul.addr %s1946, 8
      %s1948 = scalar_lea.vmem %s4, %s1947
      %p1949 = scmp.lt.s32.totalorder %s17, 1
      %s1950 = scalar_select %p1949, %s17, 1
      %s1951 = smul.addr %s1950, 8
      %s1952 = scalar_lea.vmem %s5, %s1951
      // Predicated region
      $region33: #{tpu_custom_call.1} parent=31 // pred_check
        %p1953 = pneg %p103
      $region34: #{tpu_custom_call.1} parent=31 // pred_check_branch
        %1955 = sbr.rel (%p1953) target = $region36
      $region35: #{tpu_custom_call.1} parent=31 // pred_region
        %s1956 = smul.u32 36, %s17
      $region36: #{tpu_custom_call.1} parent=31 // pred_fallthru
        _
      // Predicated region
      $region37: #{tpu_custom_call.1} parent=31 // pred_check
        %p1957 = pneg %p129
      $region38: #{tpu_custom_call.1} parent=31 // pred_check_branch
        %1959 = sbr.rel (%p1957) target = $region40
      $region39: #{tpu_custom_call.1} parent=31 // pred_region
        _
      $region40: #{tpu_custom_call.1} parent=31 // pred_fallthru
        _
      // Predicated region
      $region41: #{tpu_custom_call.1} parent=31 // pred_check
        %p1960 = pneg %p155
      $region42: #{tpu_custom_call.1} parent=31 // pred_check_branch
        %1962 = sbr.rel (%p1960) target = $region44
      $region43: #{tpu_custom_call.1} parent=31 // pred_region
        _
      $region44: #{tpu_custom_call.1} parent=31 // pred_fallthru
        _
    $region32: #{tpu_custom_call.1} parent=5 // pred_fallthru
      _
    %p1963 = scmp.le.s32.totalorder 2, %s12
    // Predicated region
    $region45: #{tpu_custom_call.1} parent=5 // pred_check
      %p1964 = pneg %p1963
    $region46: #{tpu_custom_call.1} parent=5 // pred_check_branch
      %1966 = sbr.rel (%p1964) target = $region48
    $region47: #{tpu_custom_call.1} parent=5 // pred_region
      %s1967 = ssub.s32 %s12, 2
      // Predicated region
      $region49: #{tpu_custom_call.1} parent=47 // pred_check
        %p1968 = pneg %p109
      $region50: #{tpu_custom_call.1} parent=47 // pred_check_branch
        %1970 = sbr.rel (%p1968) target = $region52
      $region51: #{tpu_custom_call.1} parent=47 // pred_region
        %s1971 = smul.u32 36, %s18
        %p1972 = scmp.lt.s32.totalorder %s1971, 71
        %s1973 = scalar_select %p1972, %s1971, 71
        %s1974 = smul.addr %s1973, 4
        %s1975 = scalar_lea.vmem %s3, %s1974
      $region52: #{tpu_custom_call.1} parent=47 // pred_fallthru
        _
      // Predicated region
      $region53: #{tpu_custom_call.1} parent=47 // pred_check
        %p1976 = pneg %p135
      $region54: #{tpu_custom_call.1} parent=47 // pred_check_branch
        %1978 = sbr.rel (%p1976) target = $region56
      $region55: #{tpu_custom_call.1} parent=47 // pred_region
        %p1979 = scmp.lt.s32.totalorder %s18, 1
        %s1980 = scalar_select %p1979, %s18, 1
        %s1981 = smul.addr %s1980, 8
        %s1982 = scalar_lea.vmem %s4, %s1981
      $region56: #{tpu_custom_call.1} parent=47 // pred_fallthru
        _
      // Predicated region
      $region57: #{tpu_custom_call.1} parent=47 // pred_check
        %p1983 = pneg %p161
      $region58: #{tpu_custom_call.1} parent=47 // pred_check_branch
        %1985 = sbr.rel (%p1983) target = $region60
      $region59: #{tpu_custom_call.1} parent=47 // pred_region
        %p1986 = scmp.lt.s32.totalorder %s18, 1
        %s1987 = scalar_select %p1986, %s18, 1
        %s1988 = smul.addr %s1987, 8
        %s1989 = scalar_lea.vmem %s5, %s1988
      $region60: #{tpu_custom_call.1} parent=47 // pred_fallthru
        _
    $region48: #{tpu_custom_call.1} parent=5 // pred_fallthru
      _
  $region6: #{tpu_custom_call.1} parent=0 // loop_footer
    %s16 = sadd.s32 1, %s12
  $region7: #{tpu_custom_call.1} parent=0 // loop_footer_branch
    %11 = sbr.rel target = $region3
  $region8: #{tpu_custom_call.1} parent=0 // loop_exit
    _

</llo_original>
